<compile_context>
chip_gen: v5e
topology: v5e:2x2
jax: 0.10.0
libtpu: 0.0.40
codegen_flags: <defaults>
</compile_context>

<pallas_src>
import functools
import math

import jax
import jax.numpy as jnp
from jax.experimental import pallas as pl
from jax.experimental.pallas import tpu as pltpu

EPS = 1e-12  # LayerNorm eps in the PyTorch module


# ----------------------------- in-kernel math -----------------------------
def _erf(x):
    # Abramowitz & Stegun 7.1.26 rational approximation (|err| < 1.5e-7 in f32).
    a1, a2, a3, a4, a5 = 0.254829592, -0.284496736, 1.421413741, -1.453152027, 1.061405429
    p = 0.3275911
    sgn = jnp.where(x >= 0.0, 1.0, -1.0)
    ax = jnp.abs(x)
    t = 1.0 / (1.0 + p * ax)
    y = 1.0 - ((((a5 * t + a4) * t + a3) * t + a2) * t + a1) * t * jnp.exp(-ax * ax)
    return sgn * y


def _gelu_exact(x):
    # torch.nn.GELU() default (exact, erf-based)
    return 0.5 * x * (1.0 + _erf(x * (1.0 / math.sqrt(2.0))))


def _layernorm(x, w, b):
    # Matches the PyTorch LayerNorm module: biased variance, eps inside sqrt.
    u = jnp.mean(x, axis=-1, keepdims=True)
    s = jnp.mean((x - u) ** 2, axis=-1, keepdims=True)
    return w * ((x - u) / jnp.sqrt(s + EPS)) + b


def _mm(a, b, mxu_dtype):
    # MXU matmul: (optionally) bf16 operands, always f32 accumulation.
    return jnp.dot(a.astype(mxu_dtype), b.astype(mxu_dtype),
                   preferred_element_type=jnp.float32)


# -------------------------------- kernel ----------------------------------
def transformer_block_kernel(x_ref, mask_ref, ln1w_ref, ln1b_ref, wqkv_ref, wo_ref,
                             ln2w_ref, ln2b_ref, w1_ref, w2_ref, o_ref,
                             *, batch, seq_len, head_num, mxu_dtype):
    f32 = jnp.float32
    x = x_ref[...]                                  # (B*S, D) f32, resident in VMEM
    bs, d = x.shape
    hd = d // head_num
    nb = head_num * batch                           # batched (head, batch) attention instances

    # ------------------- attention sub-block (pre-LN) -------------------
    h = _layernorm(x, ln1w_ref[...], ln1b_ref[...])
    qkv = _mm(h, wqkv_ref[...], mxu_dtype)          # fused q|k|v projection: (B*S, 3D)

    # One head-major relayout for q, k and v together (replaces 3*H lane slices + lane concat):
    # lanes regrouped as (qkv, head, hd), then heads brought to the front.
    qkv = qkv.reshape(bs, 3 * head_num, hd)
    qkv = pltpu.einshape("rgd->grd", qkv)           # (3*H, B*S, hd)
    q = qkv[0:head_num].reshape(nb, seq_len, hd) * (1.0 / math.sqrt(hd))  # scale folded into q
    k = qkv[head_num:2 * head_num].reshape(nb, seq_len, hd)
    v = qkv[2 * head_num:3 * head_num].reshape(nb, seq_len, hd)

    # Single batched contraction over all (head, batch) pairs: one big MXU op, no per-head loop.
    s = jnp.einsum('nqd,nkd->nqk', q.astype(mxu_dtype), k.astype(mxu_dtype),
                   preferred_element_type=f32)      # (H*B, S, S), f32
    s = s + mask_ref[...][None, :, :]               # (S, S) additive mask broadcast once
    m = jnp.max(s, axis=-1, keepdims=True)
    p = jnp.exp(s - m)                              # unnormalized probabilities
    l = jnp.sum(p, axis=-1, keepdims=True)          # (H*B, S, 1)
    o = jnp.einsum('nqk,nkd->nqd', p.astype(mxu_dtype), v.astype(mxu_dtype),
                   preferred_element_type=f32)      # (H*B, S, hd)
    # Delayed softmax normalization: scale the (S, hd) head outputs instead of the (S, S)
    # probability matrix; the reciprocal runs on the EUP slot.
    o = o * pl.reciprocal(l, approx=True)

    # Merge heads back: (H*B, S, hd) -> (B*S, H*hd) with head i at lanes [i*hd:(i+1)*hd],
    # exactly matching torch's transpose(1,2).contiguous().view(B, S, -1).
    o = pltpu.einshape("grd->rgd", o.reshape(head_num, bs, hd))
    attn = o.reshape(bs, d)
    x = x + _mm(attn, wo_ref[...], mxu_dtype)       # single (B*S, D) x (D, D) output projection

    # ------------------ feed-forward sub-block (pre-LN) ------------------
    h2 = _layernorm(x, ln2w_ref[...], ln2b_ref[...])
    g = _gelu_exact(_mm(h2, w1_ref[...], mxu_dtype))
    o_ref[...] = x + _mm(g, w2_ref[...], mxu_dtype)


# ------------------------------- wrapper -----------------------------------
def transformer_block(x, mask, params, *, mxu_dtype=None):
    B, S, D = x.shape
    H = params["head_num"]
    F = params["w1"].shape[1]

    if mxu_dtype is None:
        # bf16 MXU operands at real model widths (native MXU path on v5e/v6e/v7x); exact f32
        # operands at tiny widths where bit-near parity with the torch module matters more.
        mxu_dtype = jnp.bfloat16 if D >= 256 else jnp.float32

    kernel = functools.partial(transformer_block_kernel,
                               batch=B, seq_len=S, head_num=H, mxu_dtype=mxu_dtype)

    # Resident-VMEM estimate (weights + activations, f32) -> explicit scoped-VMEM limit,
    # clamped to 64 MiB so the same setting is valid on v7x (64 MiB physical VMEM per TC).
    weight_elems = D * 3 * D + D * D + 2 * D * F + 4 * D
    act_elems = B * S * (9 * D + F) + 2 * H * B * S * S
    vmem_limit = int(min(64 * 2**20, max(16 * 2**20, 16 * (weight_elems + act_elems))))

    vmem = pltpu.MemorySpace.VMEM
    # Single block / no grid: at the test shape every operand fits VMEM many times over, so the
    # whole block runs in one step with no per-step pipeline overhead (see TODOs at top for the
    # tiled/gridded variant needed at real sizes).
    out = pl.pallas_call(
        kernel,
        out_shape=jax.ShapeDtypeStruct((B * S, D), jnp.float32),
        in_specs=[pl.BlockSpec(memory_space=vmem)] * 10,
        out_specs=pl.BlockSpec(memory_space=vmem),
        compiler_params=pltpu.CompilerParams(vmem_limit_bytes=vmem_limit),
    )(x.reshape(B * S, D), mask,
      params["ln1_w"], params["ln1_b"], params["wqkv"], params["wo"],
      params["ln2_w"], params["ln2_b"], params["w1"], params["w2"])
    return out.reshape(B, S, D)


# --------------------------- reference (plain JAX) --------------------------
def transformer_block_ref(x, mask, params):
    def ln(t, w, b):
        u = t.mean(-1, keepdims=True)
        s = ((t - u) ** 2).mean(-1, keepdims=True)
        return w * ((t - u) / jnp.sqrt(s + EPS)) + b

    B, S, D = x.shape
    H = params["head_num"]
    Hd = D // H
    h = ln(x, params["ln1_w"], params["ln1_b"])
    qkv = h @ params["wqkv"]
    q, k, v = qkv[..., :D], qkv[..., D:2 * D], qkv[..., 2 * D:]
    q = q.reshape(B, S, H, Hd).transpose(0, 2, 1, 3)
    k = k.reshape(B, S, H, Hd).transpose(0, 2, 1, 3)
    v = v.reshape(B, S, H, Hd).transpose(0, 2, 1, 3)
    s = (q @ k.transpose(0, 1, 3, 2)) / math.sqrt(Hd) + mask
    p = jax.nn.softmax(s, axis=-1)
    a = (p @ v).transpose(0, 2, 1, 3).reshape(B, S, D) @ params["wo"]
    x = x + a
    h2 = ln(x, params["ln2_w"], params["ln2_b"])
    return x + jax.nn.gelu(h2 @ params["w1"], approximate=False) @ params["w2"]


# --------------------------- deterministic init -----------------------------
def init_params(key, dim, head_num, ffn_hidden):
    ks = jax.random.split(key, 6)

    def nrm(k, shape, scale=0.02):
        return (scale * jax.random.normal(k, shape)).astype(jnp.float32)

    wq, wk, wv = nrm(ks[0], (dim, dim)), nrm(ks[1], (dim, dim)), nrm(ks[2], (dim, dim))
    return dict(
        head_num=head_num,
        ln1_w=jnp.ones((1, dim), jnp.float32),
        ln1_b=jnp.zeros((1, dim), jnp.float32),
        wqkv=jnp.concatenate([wq, wk, wv], axis=1),   # fused (dim, 3*dim), torch q|k|v order
        wo=nrm(ks[3], (dim, dim)),
        ln2_w=jnp.ones((1, dim), jnp.float32),
        ln2_b=jnp.zeros((1, dim), jnp.float32),
        w1=nrm(ks[4], (dim, ffn_hidden)),
        w2=nrm(ks[5], (ffn_hidden, dim)),
    )


if __name__ == "__main__":
    key = jax.random.PRNGKey(0)
    kp, kx = jax.random.split(key)

    B, S, D, H, F = 2, 8, 32, 4, 64
    params = init_params(kp, D, H, F)
    x = jax.random.normal(kx, (B, S, D), dtype=jnp.float32)
    # standard causal additive mask (what this block is used with): -inf above the diagonal
    mask = jnp.triu(jnp.full((S, S), float("-inf"), dtype=jnp.float32), k=1)

    out = jax.block_until_ready(transformer_block(x, mask, params))
    assert out.shape == (B, S, D) and out.dtype == jnp.float32
    assert bool(jnp.all(jnp.isfinite(out)))

    ref = transformer_block_ref(x, mask, params)
    assert bool(jnp.allclose(out, ref, rtol=2e-2, atol=2e-2)), \
        float(jnp.max(jnp.abs(out - ref)))
    print("KERNEL_OK")
</pallas_src>

<mosaic_0001>
module attributes {stable_mosaic.version = 11 : i64} {
  func.func @transformer_block_kernel(%arg0: memref<16x32xf32, #tpu.memory_space<vmem>>, %arg1: memref<8x8xf32, #tpu.memory_space<vmem>>, %arg2: memref<1x32xf32, #tpu.memory_space<vmem>>, %arg3: memref<1x32xf32, #tpu.memory_space<vmem>>, %arg4: memref<32x96xf32, #tpu.memory_space<vmem>>, %arg5: memref<32x32xf32, #tpu.memory_space<vmem>>, %arg6: memref<1x32xf32, #tpu.memory_space<vmem>>, %arg7: memref<1x32xf32, #tpu.memory_space<vmem>>, %arg8: memref<32x64xf32, #tpu.memory_space<vmem>>, %arg9: memref<64x32xf32, #tpu.memory_space<vmem>>, %arg10: memref<16x32xf32, #tpu.memory_space<vmem>>) attributes {dimension_semantics = [], scalar_prefetch = 0 : i64, scratch_operands = 0 : i64, tpu.core_type = #tpu.core_type<tc>} {
    %c0 = arith.constant 0 : index
    %c0_0 = arith.constant 0 : index
    %0 = vector.load %arg0[%c0, %c0_0] : memref<16x32xf32, #tpu.memory_space<vmem>>, vector<16x32xf32>
    %c0_1 = arith.constant 0 : index
    %c0_2 = arith.constant 0 : index
    %1 = vector.load %arg2[%c0_1, %c0_2] : memref<1x32xf32, #tpu.memory_space<vmem>>, vector<1x32xf32>
    %c0_3 = arith.constant 0 : index
    %c0_4 = arith.constant 0 : index
    %2 = vector.load %arg3[%c0_3, %c0_4] : memref<1x32xf32, #tpu.memory_space<vmem>>, vector<1x32xf32>
    %cst = arith.constant dense<0.000000e+00> : vector<16xf32>
    %3 = vector.multi_reduction <add>, %0, %cst [1] : vector<16x32xf32> to vector<16xf32>
    %4 = vector.shape_cast %3 : vector<16xf32> to vector<16x1xf32>
    %cst_5 = arith.constant 3.200000e+01 : f32
    %5 = vector.broadcast %cst_5 : f32 to vector<16x1xf32>
    %6 = arith.divf %4, %5 : vector<16x1xf32>
    %7 = vector.broadcast %6 : vector<16x1xf32> to vector<16x32xf32>
    %8 = arith.subf %0, %7 : vector<16x32xf32>
    %9 = arith.mulf %8, %8 : vector<16x32xf32>
    %cst_6 = arith.constant dense<0.000000e+00> : vector<16xf32>
    %10 = vector.multi_reduction <add>, %9, %cst_6 [1] : vector<16x32xf32> to vector<16xf32>
    %11 = vector.shape_cast %10 : vector<16xf32> to vector<16x1xf32>
    %cst_7 = arith.constant 3.200000e+01 : f32
    %12 = vector.broadcast %cst_7 : f32 to vector<16x1xf32>
    %13 = arith.divf %11, %12 : vector<16x1xf32>
    %14 = vector.broadcast %6 : vector<16x1xf32> to vector<16x32xf32>
    %15 = arith.subf %0, %14 : vector<16x32xf32>
    %cst_8 = arith.constant 9.99999996E-13 : f32
    %16 = vector.broadcast %cst_8 : f32 to vector<16x1xf32>
    %17 = arith.addf %13, %16 : vector<16x1xf32>
    %18 = math.sqrt %17 : vector<16x1xf32>
    %19 = vector.broadcast %18 : vector<16x1xf32> to vector<16x32xf32>
    %20 = arith.divf %15, %19 : vector<16x32xf32>
    %21 = vector.broadcast %1 : vector<1x32xf32> to vector<16x32xf32>
    %22 = arith.mulf %21, %20 : vector<16x32xf32>
    %23 = vector.broadcast %2 : vector<1x32xf32> to vector<16x32xf32>
    %24 = arith.addf %22, %23 : vector<16x32xf32>
    %c0_9 = arith.constant 0 : index
    %c0_10 = arith.constant 0 : index
    %25 = vector.load %arg4[%c0_9, %c0_10] : memref<32x96xf32, #tpu.memory_space<vmem>>, vector<32x96xf32>
    %cst_11 = arith.constant dense<0.000000e+00> : vector<16x96xf32>
    %26 = tpu.matmul %24, %25, %cst_11 {dimension_numbers = #tpu.dot_dimension_numbers<[1], [0], [0], [1], [0, 0, 1, 1], [], []>} : vector<16x32xf32>, vector<32x96xf32>, vector<16x96xf32> -> vector<16x96xf32>
    %27 = vector.shape_cast %26 : vector<16x96xf32> to vector<16x12x8xf32>
    %28 = tpu.transpose %27, [1, 0, 2] : vector<16x12x8xf32> -> vector<12x16x8xf32>
    %29 = vector.extract_strided_slice %28 {offsets = [0, 0, 0], sizes = [4, 16, 8], strides = [1, 1, 1]} : vector<12x16x8xf32> to vector<4x16x8xf32>
    %30 = vector.shape_cast %29 : vector<4x16x8xf32> to vector<8x8x8xf32>
    %cst_12 = arith.constant 0.353553385 : f32
    %31 = vector.broadcast %cst_12 : f32 to vector<8x8x8xf32>
    %32 = arith.mulf %30, %31 : vector<8x8x8xf32>
    %33 = vector.extract_strided_slice %28 {offsets = [4, 0, 0], sizes = [4, 16, 8], strides = [1, 1, 1]} : vector<12x16x8xf32> to vector<4x16x8xf32>
    %34 = vector.shape_cast %33 : vector<4x16x8xf32> to vector<8x8x8xf32>
    %35 = vector.extract_strided_slice %28 {offsets = [8, 0, 0], sizes = [4, 16, 8], strides = [1, 1, 1]} : vector<12x16x8xf32> to vector<4x16x8xf32>
    %36 = vector.shape_cast %35 : vector<4x16x8xf32> to vector<8x8x8xf32>
    "tpu.trace_start"() <{level = 10 : i32, message = "nqd,nkd->nqk"}> : () -> ()
    %cst_13 = arith.constant dense<0.000000e+00> : vector<8x8x8xf32>
    %37 = tpu.matmul %32, %34, %cst_13 {dimension_numbers = #tpu.dot_dimension_numbers<[2], [2], [1], [1], [0, 0, 0, 1, 1, 1], [0], [0]>} : vector<8x8x8xf32>, vector<8x8x8xf32>, vector<8x8x8xf32> -> vector<8x8x8xf32>
    "tpu.trace_stop"() : () -> ()
    %c0_14 = arith.constant 0 : index
    %c0_15 = arith.constant 0 : index
    %38 = vector.load %arg1[%c0_14, %c0_15] : memref<8x8xf32, #tpu.memory_space<vmem>>, vector<8x8xf32>
    %39 = vector.shape_cast %38 : vector<8x8xf32> to vector<1x8x8xf32>
    %40 = vector.broadcast %39 : vector<1x8x8xf32> to vector<8x8x8xf32>
    %41 = arith.addf %37, %40 : vector<8x8x8xf32>
    %cst_16 = arith.constant dense<0xFF800000> : vector<8x8xf32>
    %42 = vector.multi_reduction <maximumf>, %41, %cst_16 [2] : vector<8x8x8xf32> to vector<8x8xf32>
    %43 = vector.shape_cast %42 : vector<8x8xf32> to vector<8x8x1xf32>
    %44 = vector.broadcast %43 : vector<8x8x1xf32> to vector<8x8x8xf32>
    %45 = arith.subf %41, %44 : vector<8x8x8xf32>
    %46 = math.exp %45 : vector<8x8x8xf32>
    %cst_17 = arith.constant dense<0.000000e+00> : vector<8x8xf32>
    %47 = vector.multi_reduction <add>, %46, %cst_17 [2] : vector<8x8x8xf32> to vector<8x8xf32>
    %48 = vector.shape_cast %47 : vector<8x8xf32> to vector<8x8x1xf32>
    "tpu.trace_start"() <{level = 10 : i32, message = "nqk,nkd->nqd"}> : () -> ()
    %cst_18 = arith.constant dense<0.000000e+00> : vector<8x8x8xf32>
    %49 = tpu.matmul %46, %36, %cst_18 {dimension_numbers = #tpu.dot_dimension_numbers<[2], [1], [1], [2], [0, 0, 0, 1, 1, 2], [0], [0]>} : vector<8x8x8xf32>, vector<8x8x8xf32>, vector<8x8x8xf32> -> vector<8x8x8xf32>
    "tpu.trace_stop"() : () -> ()
    %50 = tpu.reciprocal %48 {approx = true} : vector<8x8x1xf32> -> vector<8x8x1xf32>
    %51 = vector.broadcast %50 : vector<8x8x1xf32> to vector<8x8x8xf32>
    %52 = arith.mulf %49, %51 : vector<8x8x8xf32>
    %53 = vector.shape_cast %52 : vector<8x8x8xf32> to vector<4x16x8xf32>
    %54 = tpu.transpose %53, [1, 0, 2] : vector<4x16x8xf32> -> vector<16x4x8xf32>
    %55 = vector.shape_cast %54 : vector<16x4x8xf32> to vector<16x32xf32>
    %c0_19 = arith.constant 0 : index
    %c0_20 = arith.constant 0 : index
    %56 = vector.load %arg5[%c0_19, %c0_20] : memref<32x32xf32, #tpu.memory_space<vmem>>, vector<32x32xf32>
    %cst_21 = arith.constant dense<0.000000e+00> : vector<16x32xf32>
    %57 = tpu.matmul %55, %56, %cst_21 {dimension_numbers = #tpu.dot_dimension_numbers<[1], [0], [0], [1], [0, 0, 1, 1], [], []>} : vector<16x32xf32>, vector<32x32xf32>, vector<16x32xf32> -> vector<16x32xf32>
    %58 = arith.addf %0, %57 : vector<16x32xf32>
    %c0_22 = arith.constant 0 : index
    %c0_23 = arith.constant 0 : index
    %59 = vector.load %arg6[%c0_22, %c0_23] : memref<1x32xf32, #tpu.memory_space<vmem>>, vector<1x32xf32>
    %c0_24 = arith.constant 0 : index
    %c0_25 = arith.constant 0 : index
    %60 = vector.load %arg7[%c0_24, %c0_25] : memref<1x32xf32, #tpu.memory_space<vmem>>, vector<1x32xf32>
    %cst_26 = arith.constant dense<0.000000e+00> : vector<16xf32>
    %61 = vector.multi_reduction <add>, %58, %cst_26 [1] : vector<16x32xf32> to vector<16xf32>
    %62 = vector.shape_cast %61 : vector<16xf32> to vector<16x1xf32>
    %cst_27 = arith.constant 3.200000e+01 : f32
    %63 = vector.broadcast %cst_27 : f32 to vector<16x1xf32>
    %64 = arith.divf %62, %63 : vector<16x1xf32>
    %65 = vector.broadcast %64 : vector<16x1xf32> to vector<16x32xf32>
    %66 = arith.subf %58, %65 : vector<16x32xf32>
    %67 = arith.mulf %66, %66 : vector<16x32xf32>
    %cst_28 = arith.constant dense<0.000000e+00> : vector<16xf32>
    %68 = vector.multi_reduction <add>, %67, %cst_28 [1] : vector<16x32xf32> to vector<16xf32>
    %69 = vector.shape_cast %68 : vector<16xf32> to vector<16x1xf32>
    %cst_29 = arith.constant 3.200000e+01 : f32
    %70 = vector.broadcast %cst_29 : f32 to vector<16x1xf32>
    %71 = arith.divf %69, %70 : vector<16x1xf32>
    %72 = vector.broadcast %64 : vector<16x1xf32> to vector<16x32xf32>
    %73 = arith.subf %58, %72 : vector<16x32xf32>
    %cst_30 = arith.constant 9.99999996E-13 : f32
    %74 = vector.broadcast %cst_30 : f32 to vector<16x1xf32>
    %75 = arith.addf %71, %74 : vector<16x1xf32>
    %76 = math.sqrt %75 : vector<16x1xf32>
    %77 = vector.broadcast %76 : vector<16x1xf32> to vector<16x32xf32>
    %78 = arith.divf %73, %77 : vector<16x32xf32>
    %79 = vector.broadcast %59 : vector<1x32xf32> to vector<16x32xf32>
    %80 = arith.mulf %79, %78 : vector<16x32xf32>
    %81 = vector.broadcast %60 : vector<1x32xf32> to vector<16x32xf32>
    %82 = arith.addf %80, %81 : vector<16x32xf32>
    %c0_31 = arith.constant 0 : index
    %c0_32 = arith.constant 0 : index
    %83 = vector.load %arg8[%c0_31, %c0_32] : memref<32x64xf32, #tpu.memory_space<vmem>>, vector<32x64xf32>
    %cst_33 = arith.constant dense<0.000000e+00> : vector<16x64xf32>
    %84 = tpu.matmul %82, %83, %cst_33 {dimension_numbers = #tpu.dot_dimension_numbers<[1], [0], [0], [1], [0, 0, 1, 1], [], []>} : vector<16x32xf32>, vector<32x64xf32>, vector<16x64xf32> -> vector<16x64xf32>
    %cst_34 = arith.constant 5.000000e-01 : f32
    %85 = vector.broadcast %cst_34 : f32 to vector<16x64xf32>
    %86 = arith.mulf %85, %84 : vector<16x64xf32>
    %cst_35 = arith.constant 0.707106769 : f32
    %87 = vector.broadcast %cst_35 : f32 to vector<16x64xf32>
    %88 = arith.mulf %84, %87 : vector<16x64xf32>
    %cst_36 = arith.constant 0.000000e+00 : f32
    %89 = vector.broadcast %cst_36 : f32 to vector<16x64xf32>
    %90 = arith.cmpf oge, %88, %89 : vector<16x64xf32>
    %cst_37 = arith.constant 1.000000e+00 : f32
    %cst_38 = arith.constant -1.000000e+00 : f32
    %91 = vector.broadcast %cst_37 : f32 to vector<16x64xf32>
    %92 = vector.broadcast %cst_38 : f32 to vector<16x64xf32>
    %93 = arith.select %90, %91, %92 : vector<16x64xi1>, vector<16x64xf32>
    %94 = math.absf %88 : vector<16x64xf32>
    %cst_39 = arith.constant 0.327591091 : f32
    %95 = vector.broadcast %cst_39 : f32 to vector<16x64xf32>
    %96 = arith.mulf %95, %94 : vector<16x64xf32>
    %cst_40 = arith.constant 1.000000e+00 : f32
    %97 = vector.broadcast %cst_40 : f32 to vector<16x64xf32>
    %98 = arith.addf %97, %96 : vector<16x64xf32>
    %cst_41 = arith.constant 1.000000e+00 : f32
    %99 = vector.broadcast %cst_41 : f32 to vector<16x64xf32>
    %100 = arith.divf %99, %98 : vector<16x64xf32>
    %cst_42 = arith.constant 1.06140542 : f32
    %101 = vector.broadcast %cst_42 : f32 to vector<16x64xf32>
    %102 = arith.mulf %101, %100 : vector<16x64xf32>
    %cst_43 = arith.constant -1.45315206 : f32
    %103 = vector.broadcast %cst_43 : f32 to vector<16x64xf32>
    %104 = arith.addf %102, %103 : vector<16x64xf32>
    %105 = arith.mulf %104, %100 : vector<16x64xf32>
    %cst_44 = arith.constant 1.42141378 : f32
    %106 = vector.broadcast %cst_44 : f32 to vector<16x64xf32>
    %107 = arith.addf %105, %106 : vector<16x64xf32>
    %108 = arith.mulf %107, %100 : vector<16x64xf32>
    %cst_45 = arith.constant -0.284496725 : f32
    %109 = vector.broadcast %cst_45 : f32 to vector<16x64xf32>
    %110 = arith.addf %108, %109 : vector<16x64xf32>
    %111 = arith.mulf %110, %100 : vector<16x64xf32>
    %cst_46 = arith.constant 0.254829586 : f32
    %112 = vector.broadcast %cst_46 : f32 to vector<16x64xf32>
    %113 = arith.addf %111, %112 : vector<16x64xf32>
    %114 = arith.mulf %113, %100 : vector<16x64xf32>
    %cst_47 = arith.constant 0.000000e+00 : f32
    %115 = vector.broadcast %cst_47 : f32 to vector<16x64xf32>
    %116 = arith.subf %115, %94 : vector<16x64xf32>
    %117 = arith.mulf %116, %94 : vector<16x64xf32>
    %118 = math.exp %117 : vector<16x64xf32>
    %119 = arith.mulf %114, %118 : vector<16x64xf32>
    %cst_48 = arith.constant 1.000000e+00 : f32
    %120 = vector.broadcast %cst_48 : f32 to vector<16x64xf32>
    %121 = arith.subf %120, %119 : vector<16x64xf32>
    %122 = arith.mulf %93, %121 : vector<16x64xf32>
    %cst_49 = arith.constant 1.000000e+00 : f32
    %123 = vector.broadcast %cst_49 : f32 to vector<16x64xf32>
    %124 = arith.addf %123, %122 : vector<16x64xf32>
    %125 = arith.mulf %86, %124 : vector<16x64xf32>
    %c0_50 = arith.constant 0 : index
    %c0_51 = arith.constant 0 : index
    %126 = vector.load %arg9[%c0_50, %c0_51] : memref<64x32xf32, #tpu.memory_space<vmem>>, vector<64x32xf32>
    %cst_52 = arith.constant dense<0.000000e+00> : vector<16x32xf32>
    %127 = tpu.matmul %125, %126, %cst_52 {dimension_numbers = #tpu.dot_dimension_numbers<[1], [0], [0], [1], [0, 0, 1, 1], [], []>} : vector<16x64xf32>, vector<64x32xf32>, vector<16x32xf32> -> vector<16x32xf32>
    %128 = arith.addf %58, %127 : vector<16x32xf32>
    %c0_53 = arith.constant 0 : index
    %c0_54 = arith.constant 0 : index
    %129 = vector.load %arg10[%c0_53, %c0_54] : memref<16x32xf32, #tpu.memory_space<vmem>>, vector<16x32xf32>
    tpu.vector_store %arg10[%c0_53, %c0_54], %128 {strides = array<i32>} : memref<16x32xf32, #tpu.memory_space<vmem>>, vector<16x32xf32>,
    return
  }
}

</mosaic_0001>

<llo_original>
// kernel: tpu_custom_call.1
$region0: #{tpu_custom_call.1}
  #allocation0 [shape = 'u32[]', space=smem, size = 0x4, offset = 0x4, fixed_abs, tag = 'smem constant byte address 0x4 - core index']
  #allocation1 [shape = 'u32[72,128]{1,0:T(1,128)}', space=vmem, size = 0x9000, scoped, tag = 'internal scratch']
  %s0 = inlined_call_operand.hbm [shape: f32[16,32], index: 0, kind: input, shape index: {}]
  %s1 = inlined_call_operand.hbm [shape: f32[8,8], index: 1, kind: input, shape index: {}]
  %s2 = inlined_call_operand.vmem [shape: f32[1,32], index: 2, kind: input, shape index: {}]
  %s3 = inlined_call_operand.hbm [shape: f32[1,32], index: 3, kind: input, shape index: {}]
  %s4 = inlined_call_operand.vmem [shape: f32[32,96], index: 4, kind: input, shape index: {}]
  %s5 = inlined_call_operand.vmem [shape: f32[32,32], index: 5, kind: input, shape index: {}]
  %s6 = inlined_call_operand.vmem [shape: f32[1,32], index: 6, kind: input, shape index: {}]
  %s7 = inlined_call_operand.vmem [shape: f32[1,32], index: 7, kind: input, shape index: {}]
  %s8 = inlined_call_operand.vmem [shape: f32[32,64], index: 8, kind: input, shape index: {}]
  %s9 = inlined_call_operand.vmem [shape: f32[64,32], index: 9, kind: input, shape index: {}]
  %s10 = inlined_call_operand.hbm [shape: f32[16,32], index: 10, kind: output, shape index: {}]
  %s11 = sld [smem:[#allocation0]]
  $region62: #{tpu_custom_call.1} parent=0
    _
  %s13 = ssub.s32 1, %s11
  %s14 = scalar_select 0, %s13, %s11
  $region1: #{tpu_custom_call.1} parent=0
    #allocation2 [shape = 'u8[8192]{0}', space=vmem, size = 0x2000, scoped, tag = 'input window, operand 0, single buffered']
    #allocation3 [shape = 's32[1]{0}', space=sflag, size = 0x4, scoped, tag = 'scoped memory for tpu_custom_call.1']
    #allocation4 [shape = 's32[1]{0}', space=sflag, size = 0x4, scoped, tag = 'scoped memory for tpu_custom_call.1']
    #allocation5 [shape = 'u8[4096]{0}', space=vmem, size = 0x1000, scoped, tag = 'input window, operand 1, single buffered']
    #allocation6 [shape = 's32[1]{0}', space=sflag, size = 0x4, scoped, tag = 'scoped memory for tpu_custom_call.1']
    #allocation7 [shape = 'u8[512]{0}', space=vmem, size = 0x400, scoped, tag = 'input window, operand 3, single buffered']
    #allocation8 [shape = 'u8[8192]{0}', space=vmem, size = 0x2000, scoped, tag = 'output window, operand 0, single buffered']
    %15 = vsyncpa [#allocation3], 0
    %16 = vsyncpa [#allocation6], 0
    %17 = vsyncpa [#allocation4], 0
    // Predicated region
    $region2: #{tpu_custom_call.1} parent=1 // pred_check
      _
    $region3: #{tpu_custom_call.1} parent=1 // pred_check_branch
      %19 = sbr.rel (0) target = $region5
    $region4: #{tpu_custom_call.1} parent=1 // pred_region
      %21 = vsyncadd [#allocation3], 0
      %s22 = sshll.u32 %s0, 4
      %s23 = int_to_ptr.hbm [resolvable:$true] %s22
      %s24 = sshll.u32 [#allocation2], 4
      %s25 = int_to_ptr.vmem [resolvable:$true] %s24
      %30 = dma.hbm_to_vmem [thread:$0]  %s23, 256, %s25, [#allocation3], 128, 128, 8
    $region5: #{tpu_custom_call.1} parent=1 // pred_fallthru
      _
    // Predicated region
    $region6: #{tpu_custom_call.1} parent=1 // pred_check
      _
    $region7: #{tpu_custom_call.1} parent=1 // pred_check_branch
      %32 = sbr.rel (0) target = $region9
    $region8: #{tpu_custom_call.1} parent=1 // pred_region
      %34 = vsyncadd [#allocation6], 0
      %s36 = sshll.u32 %s1, 4
      %s37 = int_to_ptr.hbm [resolvable:$true] %s36
      %s38 = sshll.u32 [#allocation5], 4
      %s39 = int_to_ptr.vmem [resolvable:$true] %s38
      %41 = dma.hbm_to_vmem [thread:$0]  %s37, 128, %s39, [#allocation6]
    $region9: #{tpu_custom_call.1} parent=1 // pred_fallthru
      _
    // Predicated region
    $region10: #{tpu_custom_call.1} parent=1 // pred_check
      _
    $region11: #{tpu_custom_call.1} parent=1 // pred_check_branch
      %43 = sbr.rel (0) target = $region13
    $region12: #{tpu_custom_call.1} parent=1 // pred_region
      _
    $region13: #{tpu_custom_call.1} parent=1 // pred_fallthru
      _
    // Predicated region
    $region14: #{tpu_custom_call.1} parent=1 // pred_check
      _
    $region15: #{tpu_custom_call.1} parent=1 // pred_check_branch
      %45 = sbr.rel (0) target = $region17
    $region16: #{tpu_custom_call.1} parent=1 // pred_region
      %47 = vsyncadd [#allocation6], 0
      %s49 = sshll.u32 %s3, 4
      %s50 = int_to_ptr.hbm [resolvable:$true] %s49
      %s51 = sshll.u32 [#allocation7], 4
      %s52 = int_to_ptr.vmem [resolvable:$true] %s51
      %54 = dma.hbm_to_vmem [thread:$0]  %s50, 16, %s52, [#allocation6]
    $region17: #{tpu_custom_call.1} parent=1 // pred_fallthru
      _
    // Predicated region
    $region18: #{tpu_custom_call.1} parent=1 // pred_check
      _
    $region19: #{tpu_custom_call.1} parent=1 // pred_check_branch
      %56 = sbr.rel (0) target = $region21
    $region20: #{tpu_custom_call.1} parent=1 // pred_region
      _
    $region21: #{tpu_custom_call.1} parent=1 // pred_fallthru
      _
    // Predicated region
    $region22: #{tpu_custom_call.1} parent=1 // pred_check
      _
    $region23: #{tpu_custom_call.1} parent=1 // pred_check_branch
      %58 = sbr.rel (0) target = $region25
    $region24: #{tpu_custom_call.1} parent=1 // pred_region
      _
    $region25: #{tpu_custom_call.1} parent=1 // pred_fallthru
      _
    // Predicated region
    $region26: #{tpu_custom_call.1} parent=1 // pred_check
      _
    $region27: #{tpu_custom_call.1} parent=1 // pred_check_branch
      %60 = sbr.rel (0) target = $region29
    $region28: #{tpu_custom_call.1} parent=1 // pred_region
      _
    $region29: #{tpu_custom_call.1} parent=1 // pred_fallthru
      _
    // Predicated region
    $region30: #{tpu_custom_call.1} parent=1 // pred_check
      _
    $region31: #{tpu_custom_call.1} parent=1 // pred_check_branch
      %62 = sbr.rel (0) target = $region33
    $region32: #{tpu_custom_call.1} parent=1 // pred_region
      _
    $region33: #{tpu_custom_call.1} parent=1 // pred_fallthru
      _
    // Predicated region
    $region34: #{tpu_custom_call.1} parent=1 // pred_check
      _
    $region35: #{tpu_custom_call.1} parent=1 // pred_check_branch
      %64 = sbr.rel (0) target = $region37
    $region36: #{tpu_custom_call.1} parent=1 // pred_region
      _
    $region37: #{tpu_custom_call.1} parent=1 // pred_fallthru
      _
    // Predicated region
    $region38: #{tpu_custom_call.1} parent=1 // pred_check
      _
    $region39: #{tpu_custom_call.1} parent=1 // pred_check_branch
      %66 = sbr.rel (0) target = $region41
    $region40: #{tpu_custom_call.1} parent=1 // pred_region
      _
    $region41: #{tpu_custom_call.1} parent=1 // pred_fallthru
      _
    // Predicated region
    $region42: #{tpu_custom_call.1} parent=1 // pred_check
      _
    $region43: #{tpu_custom_call.1} parent=1 // pred_check_branch
      %68 = sbr.rel (0) target = $region45
    $region44: #{tpu_custom_call.1} parent=1 // pred_region
      %70 = dma.done [#allocation3], 256
    $region45: #{tpu_custom_call.1} parent=1 // pred_fallthru
      _
    // Predicated region
    $region46: #{tpu_custom_call.1} parent=1 // pred_check
      _
    $region47: #{tpu_custom_call.1} parent=1 // pred_check_branch
      %72 = sbr.rel (0) target = $region49
    $region48: #{tpu_custom_call.1} parent=1 // pred_region
      %74 = dma.done [#allocation6], 128
    $region49: #{tpu_custom_call.1} parent=1 // pred_fallthru
      _
    // Predicated region
    $region50: #{tpu_custom_call.1} parent=1 // pred_check
      _
    $region51: #{tpu_custom_call.1} parent=1 // pred_check_branch
      %76 = sbr.rel (0) target = $region53
    $region52: #{tpu_custom_call.1} parent=1 // pred_region
      %78 = dma.done [#allocation6], 16
    $region53: #{tpu_custom_call.1} parent=1 // pred_fallthru
      _
    %v79 = vld [vmem:[#allocation2] sm:$0xff]
    %v80 = vld [vmem:[#allocation2 + $0x8] sm:$0xff]
    %v81 = vld [vmem:[%s2] sm:$0x1]
    %v82 = vld [vmem:[#allocation7] sm:$0x1]
    %vm83 = vcmask 261120
    %v84 = vsel %vm83, %v79, 0.0
    %85 = vadd.xlane.f32.xlu0 %v84
    %v86 = vpop.xlane.xlu0 %85
    %v87 = vsel %vm83, %v80, 0.0
    %88 = vadd.xlane.f32.xlu0 %v87
    %v89 = vpop.xlane.xlu0 %88
    %v90 = vrcp.pop 32.0
    %v91 = vmul.f32 32.0, %v90
    %v92 = vsub.f32 1.0, %v91
    %v93 = vmul.f32 %v90, %v92
    %v94 = vadd.f32 %v90, %v93
    %vm95 = vweird.f32 %v90
    %v96 = vsel %vm95, %v90, %v94
    %v97 = vmul.f32 %v86, %v96
    %v98 = vmul.f32 %v89, %v96
    %v99 = vsub.f32 %v79, %v97
    %v100 = vsub.f32 %v80, %v98
    %v101 = vmul.f32 %v99, %v99
    %v102 = vmul.f32 %v100, %v100
    %v103 = vsel %vm83, %v101, 0.0
    %104 = vadd.xlane.f32.xlu0 %v103
    %v105 = vpop.xlane.xlu0 %104
    %v106 = vsel %vm83, %v102, 0.0
    %107 = vadd.xlane.f32.xlu0 %v106
    %v108 = vpop.xlane.xlu0 %107
    %v109 = vmul.f32 %v105, %v96
    %v110 = vmul.f32 %v108, %v96
    %v111 = vadd.f32 %v109, 1e-12
    %v112 = vadd.f32 %v110, 1e-12
    %v113 = vrsqrt.pop %v111
    %v114 = vmul.f32 %v113, %v111
    %v115 = vmul.f32 %v114, %v113
    %v116 = vmul.f32 0.5, %v115
    %v117 = vsub.f32 1.5, %v116
    %v118 = vmul.f32 %v113, %v117
    %v119 = vmul.f32 %v111, %v118
    %vm120 = vcmp.eq.f32.partialorder %v111, inf
    %v121 = vsel %vm120, %v111, %v119
    %vm122 = vcmp.eq.f32.partialorder %v111, 0.0
    %v123 = vand.u32 %v111, 2147483648
    %v124 = vsel %vm122, %v123, %v121
    %v125 = vrsqrt.pop %v112
    %v126 = vmul.f32 %v125, %v112
    %v127 = vmul.f32 %v126, %v125
    %v128 = vmul.f32 0.5, %v127
    %v129 = vsub.f32 1.5, %v128
    %v130 = vmul.f32 %v125, %v129
    %v131 = vmul.f32 %v112, %v130
    %vm132 = vcmp.eq.f32.partialorder %v112, inf
    %v133 = vsel %vm132, %v112, %v131
    %vm134 = vcmp.eq.f32.partialorder %v112, 0.0
    %v135 = vand.u32 %v112, 2147483648
    %v136 = vsel %vm134, %v135, %v133
    %v137 = vrcp.pop %v124
    %v138 = vmul.f32 %v124, %v137
    %v139 = vsub.f32 1.0, %v138
    %v140 = vmul.f32 %v137, %v139
    %v141 = vadd.f32 %v137, %v140
    %vm142 = vweird.f32 %v124
    %vm143 = vweird.f32 %v137
    %vm144 = vmor %vm142, %vm143
    %v145 = vsel %vm144, %v137, %v141
    %v146 = vand.u32 2147483647, %v124
    %vm147 = vcmp.eq.f32.partialorder %v146, 8.507059e+37
    %v148 = vand.u32 %v124, 2147483648
    %v149 = vor.u32 1.1754944e-38, %v148
    %v150 = vsel %vm147, %v149, %v145
    %v151 = vmul.f32 %v99, %v150
    %v152 = vrcp.pop %v136
    %v153 = vmul.f32 %v136, %v152
    %v154 = vsub.f32 1.0, %v153
    %v155 = vmul.f32 %v152, %v154
    %v156 = vadd.f32 %v152, %v155
    %vm157 = vweird.f32 %v136
    %vm158 = vweird.f32 %v152
    %vm159 = vmor %vm157, %vm158
    %v160 = vsel %vm159, %v152, %v156
    %v161 = vand.u32 2147483647, %v136
    %vm162 = vcmp.eq.f32.partialorder %v161, 8.507059e+37
    %v163 = vand.u32 %v136, 2147483648
    %v164 = vor.u32 1.1754944e-38, %v163
    %v165 = vsel %vm162, %v164, %v160
    %v166 = vmul.f32 %v100, %v165
    %v168 = vperm.slane %v81, 0
    %v170 = vmul.f32 %v168, %v151
    %v171 = vmul.f32 %v168, %v166
    %v173 = vperm.slane %v82, 0
    %v175 = vadd.f32 %v170, %v173
    %v176 = vadd.f32 %v171, %v173
    %v177 = vld [vmem:[%s4] sm:$0xff]
    %v178 = vld [vmem:[%s4 + $0x8] sm:$0xff]
    %v179 = vld [vmem:[%s4 + $0x10] sm:$0xff]
    %v180 = vld [vmem:[%s4 + $0x18] sm:$0xff]
    %v182 = vsel %vm83, %v175, 0
    %v185 = vsel %vm83, %v176, 0
    %187 = vmatpush.msra.mxu0 0.0
    %188 = vmatpush.msra.mxu0 0.0
    %189 = vmatpush.msra.mxu0 0.0
    %190 = vmatpush.msra.mxu0 0.0
    %191 = vmatpush.msra.mxu0 0.0
    %192 = vmatpush.msra.mxu0 0.0
    %193 = vmatpush.msra.mxu0 0.0
    %194 = vmatpush.msra.mxu0 0.0
    %195 = vmatpush.msra.mxu0 0.0
    %196 = vmatpush.msra.mxu0 0.0
    %197 = vmatpush.msra.mxu0 0.0
    %198 = vmatpush.msra.mxu0 0.0
    %199 = vmatpush.msra.mxu0 %v180
    %200 = vmatpush.msra.mxu0 %v179
    %201 = vmatpush.msra.mxu0 %v178
    %202 = vmatpush.msra.mxu0 %v177
    %203 = vmatmul.f32.gmra.mxu0 %v182
    %v204 = vpop.f32.mrf.mxu0
    %v205 = vadd.f32 0.0, %v204
    %206 = vmatmul.f32.gmra.mxu0 %v185
    %v207 = vpop.f32.mrf.mxu0
    %v208 = vadd.f32 0.0, %v207
    %209 = vdwg.mxu0
    %212 = vrot.lane.b32.xlu0 %v205, 120
    %v213 = vpop.permute.xlu0 %212
    %214 = vrot.lane.b32.xlu0 %v208, 120
    %v215 = vpop.permute.xlu0 %214
    %218 = vrot.lane.b32.xlu0 %v205, 112
    %v219 = vpop.permute.xlu0 %218
    %220 = vrot.lane.b32.xlu0 %v208, 112
    %v221 = vpop.permute.xlu0 %220
    %224 = vrot.lane.b32.xlu0 %v205, 104
    %v225 = vpop.permute.xlu0 %224
    %226 = vrot.lane.b32.xlu0 %v208, 104
    %v227 = vpop.permute.xlu0 %226
    %230 = vrot.lane.b32.xlu0 %v205, 96
    %v231 = vpop.permute.xlu0 %230
    %232 = vrot.lane.b32.xlu0 %v208, 96
    %v233 = vpop.permute.xlu0 %232
    %236 = vrot.lane.b32.xlu0 %v205, 88
    %v237 = vpop.permute.xlu0 %236
    %238 = vrot.lane.b32.xlu0 %v208, 88
    %v239 = vpop.permute.xlu0 %238
    %242 = vrot.lane.b32.xlu0 %v205, 80
    %v243 = vpop.permute.xlu0 %242
    %244 = vrot.lane.b32.xlu0 %v208, 80
    %v245 = vpop.permute.xlu0 %244
    %248 = vrot.lane.b32.xlu0 %v205, 72
    %v249 = vpop.permute.xlu0 %248
    %250 = vrot.lane.b32.xlu0 %v208, 72
    %v251 = vpop.permute.xlu0 %250
    %254 = vrot.lane.b32.xlu0 %v205, 64
    %v255 = vpop.permute.xlu0 %254
    %256 = vrot.lane.b32.xlu0 %v208, 64
    %v257 = vpop.permute.xlu0 %256
    %260 = vrot.lane.b32.xlu0 %v205, 56
    %v261 = vpop.permute.xlu0 %260
    %262 = vrot.lane.b32.xlu0 %v208, 56
    %v263 = vpop.permute.xlu0 %262
    %266 = vrot.lane.b32.xlu0 %v205, 48
    %v267 = vpop.permute.xlu0 %266
    %268 = vrot.lane.b32.xlu0 %v208, 48
    %v269 = vpop.permute.xlu0 %268
    %272 = vrot.lane.b32.xlu0 %v205, 40
    %v273 = vpop.permute.xlu0 %272
    %274 = vrot.lane.b32.xlu0 %v208, 40
    %v275 = vpop.permute.xlu0 %274
    %v278 = vrot.slane %v219, 4
    %vm279 = vcmask 1047556
    %v280 = vsel %vm279, %v278, %v205
    %v281 = vrot.slane %v205, 4
    %v282 = vsel %vm279, %v219, %v281
    %v284 = vunpack.c.l.s4 1983009808
    %v285 = vunpack.c.0.s8 %v284
    %v286 = vperm.slane %v280, %v285
    %v288 = vunpack.c.l.s4 1983009808
    %v289 = vunpack.c.0.s8 %v288
    %v290 = vperm.slane %v282, %v289
    %v291 = vrot.slane %v225, 4
    %v292 = vsel %vm279, %v291, %v213
    %v293 = vrot.slane %v213, 4
    %v294 = vsel %vm279, %v225, %v293
    %v296 = vunpack.c.l.s4 1983009808
    %v297 = vunpack.c.0.s8 %v296
    %v298 = vperm.slane %v292, %v297
    %v300 = vunpack.c.l.s4 1983009808
    %v301 = vunpack.c.0.s8 %v300
    %v302 = vperm.slane %v294, %v301
    %v303 = vrot.slane %v243, 4
    %v304 = vsel %vm279, %v303, %v231
    %v305 = vrot.slane %v231, 4
    %v306 = vsel %vm279, %v243, %v305
    %v308 = vunpack.c.l.s4 1983009808
    %v309 = vunpack.c.0.s8 %v308
    %v310 = vperm.slane %v304, %v309
    %v312 = vunpack.c.l.s4 1983009808
    %v313 = vunpack.c.0.s8 %v312
    %v314 = vperm.slane %v306, %v313
    %v315 = vrot.slane %v249, 4
    %v316 = vsel %vm279, %v315, %v237
    %v317 = vrot.slane %v237, 4
    %v318 = vsel %vm279, %v249, %v317
    %v320 = vunpack.c.l.s4 1983009808
    %v321 = vunpack.c.0.s8 %v320
    %v322 = vperm.slane %v316, %v321
    %v324 = vunpack.c.l.s4 1983009808
    %v325 = vunpack.c.0.s8 %v324
    %v326 = vperm.slane %v318, %v325
    %v327 = vrot.slane %v298, 4
    %v328 = vsel %vm279, %v327, %v286
    %v329 = vrot.slane %v286, 4
    %v330 = vsel %vm279, %v298, %v329
    %v332 = vunpack.c.l.s4 1934713408
    %v333 = vunpack.c.0.s8 %v332
    %v334 = vperm.slane %v328, %v333
    %v336 = vunpack.c.l.s4 1934713408
    %v337 = vunpack.c.0.s8 %v336
    %v338 = vperm.slane %v330, %v337
    %v339 = vrot.slane %v302, 4
    %v340 = vsel %vm279, %v339, %v290
    %v341 = vrot.slane %v290, 4
    %v342 = vsel %vm279, %v302, %v341
    %v344 = vunpack.c.l.s4 1934713408
    %v345 = vunpack.c.0.s8 %v344
    %v346 = vperm.slane %v340, %v345
    %v348 = vunpack.c.l.s4 1934713408
    %v349 = vunpack.c.0.s8 %v348
    %v350 = vperm.slane %v342, %v349
    %v351 = vrot.slane %v322, 4
    %v352 = vsel %vm279, %v351, %v310
    %v353 = vrot.slane %v310, 4
    %v354 = vsel %vm279, %v322, %v353
    %v356 = vunpack.c.l.s4 1934713408
    %v357 = vunpack.c.0.s8 %v356
    %v358 = vperm.slane %v352, %v357
    %v360 = vunpack.c.l.s4 1934713408
    %v361 = vunpack.c.0.s8 %v360
    %v362 = vperm.slane %v354, %v361
    %v363 = vrot.slane %v326, 4
    %v364 = vsel %vm279, %v363, %v314
    %v365 = vrot.slane %v314, 4
    %v366 = vsel %vm279, %v326, %v365
    %v368 = vunpack.c.l.s4 1934713408
    %v369 = vunpack.c.0.s8 %v368
    %v370 = vperm.slane %v364, %v369
    %v372 = vunpack.c.l.s4 1934713408
    %v373 = vunpack.c.0.s8 %v372
    %v374 = vperm.slane %v366, %v373
    %v375 = vrot.slane %v358, 4
    %v376 = vsel %vm279, %v375, %v334
    %v377 = vrot.slane %v334, 4
    %v378 = vsel %vm279, %v358, %v377
    %v379 = vrot.slane %v362, 4
    %v380 = vsel %vm279, %v379, %v338
    %v381 = vrot.slane %v338, 4
    %v382 = vsel %vm279, %v362, %v381
    %v383 = vrot.slane %v370, 4
    %v384 = vsel %vm279, %v383, %v346
    %v385 = vrot.slane %v346, 4
    %v386 = vsel %vm279, %v370, %v385
    %v387 = vrot.slane %v374, 4
    %v388 = vsel %vm279, %v387, %v350
    %v389 = vrot.slane %v350, 4
    %v390 = vsel %vm279, %v374, %v389
    %v391 = vrot.slane %v267, 4
    %v392 = vsel %vm279, %v391, %v255
    %v393 = vrot.slane %v255, 4
    %v394 = vsel %vm279, %v267, %v393
    %v396 = vunpack.c.l.s4 1983009808
    %v397 = vunpack.c.0.s8 %v396
    %v398 = vperm.slane %v392, %v397
    %v400 = vunpack.c.l.s4 1983009808
    %v401 = vunpack.c.0.s8 %v400
    %v402 = vperm.slane %v394, %v401
    %v403 = vrot.slane %v273, 4
    %v404 = vsel %vm279, %v403, %v261
    %v405 = vrot.slane %v261, 4
    %v406 = vsel %vm279, %v273, %v405
    %v408 = vunpack.c.l.s4 1983009808
    %v409 = vunpack.c.0.s8 %v408
    %v410 = vperm.slane %v404, %v409
    %v412 = vunpack.c.l.s4 1983009808
    %v413 = vunpack.c.0.s8 %v412
    %v414 = vperm.slane %v406, %v413
    %v415 = vrot.slane %v410, 4
    %v416 = vsel %vm279, %v415, %v398
    %v417 = vrot.slane %v398, 4
    %v418 = vsel %vm279, %v410, %v417
    %v420 = vunpack.c.l.s4 1934713408
    %v421 = vunpack.c.0.s8 %v420
    %v422 = vperm.slane %v416, %v421
    %v424 = vunpack.c.l.s4 1934713408
    %v425 = vunpack.c.0.s8 %v424
    %v426 = vperm.slane %v418, %v425
    %v427 = vrot.slane %v414, 4
    %v428 = vsel %vm279, %v427, %v402
    %v429 = vrot.slane %v402, 4
    %v430 = vsel %vm279, %v414, %v429
    %v432 = vunpack.c.l.s4 1934713408
    %v433 = vunpack.c.0.s8 %v432
    %v434 = vperm.slane %v428, %v433
    %v436 = vunpack.c.l.s4 1934713408
    %v437 = vunpack.c.0.s8 %v436
    %v438 = vperm.slane %v430, %v437
    %v439 = vrot.slane %v422, 4
    %v440 = vsel %vm279, 0.0, %v439
    %v441 = vrot.slane %v426, 4
    %v442 = vsel %vm279, 0.0, %v441
    %v443 = vrot.slane %v434, 4
    %v444 = vsel %vm279, 0.0, %v443
    %v445 = vrot.slane %v438, 4
    %v446 = vsel %vm279, 0.0, %v445
    %v447 = vrot.slane %v221, 4
    %v448 = vsel %vm279, %v447, %v208
    %v449 = vrot.slane %v208, 4
    %v450 = vsel %vm279, %v221, %v449
    %v452 = vunpack.c.l.s4 1983009808
    %v453 = vunpack.c.0.s8 %v452
    %v454 = vperm.slane %v448, %v453
    %v456 = vunpack.c.l.s4 1983009808
    %v457 = vunpack.c.0.s8 %v456
    %v458 = vperm.slane %v450, %v457
    %v459 = vrot.slane %v227, 4
    %v460 = vsel %vm279, %v459, %v215
    %v461 = vrot.slane %v215, 4
    %v462 = vsel %vm279, %v227, %v461
    %v464 = vunpack.c.l.s4 1983009808
    %v465 = vunpack.c.0.s8 %v464
    %v466 = vperm.slane %v460, %v465
    %v468 = vunpack.c.l.s4 1983009808
    %v469 = vunpack.c.0.s8 %v468
    %v470 = vperm.slane %v462, %v469
    %v471 = vrot.slane %v245, 4
    %v472 = vsel %vm279, %v471, %v233
    %v473 = vrot.slane %v233, 4
    %v474 = vsel %vm279, %v245, %v473
    %v476 = vunpack.c.l.s4 1983009808
    %v477 = vunpack.c.0.s8 %v476
    %v478 = vperm.slane %v472, %v477
    %v480 = vunpack.c.l.s4 1983009808
    %v481 = vunpack.c.0.s8 %v480
    %v482 = vperm.slane %v474, %v481
    %v483 = vrot.slane %v251, 4
    %v484 = vsel %vm279, %v483, %v239
    %v485 = vrot.slane %v239, 4
    %v486 = vsel %vm279, %v251, %v485
    %v488 = vunpack.c.l.s4 1983009808
    %v489 = vunpack.c.0.s8 %v488
    %v490 = vperm.slane %v484, %v489
    %v492 = vunpack.c.l.s4 1983009808
    %v493 = vunpack.c.0.s8 %v492
    %v494 = vperm.slane %v486, %v493
    %v495 = vrot.slane %v466, 4
    %v496 = vsel %vm279, %v495, %v454
    %v497 = vrot.slane %v454, 4
    %v498 = vsel %vm279, %v466, %v497
    %v500 = vunpack.c.l.s4 1934713408
    %v501 = vunpack.c.0.s8 %v500
    %v502 = vperm.slane %v496, %v501
    %v504 = vunpack.c.l.s4 1934713408
    %v505 = vunpack.c.0.s8 %v504
    %v506 = vperm.slane %v498, %v505
    %v507 = vrot.slane %v470, 4
    %v508 = vsel %vm279, %v507, %v458
    %v509 = vrot.slane %v458, 4
    %v510 = vsel %vm279, %v470, %v509
    %v512 = vunpack.c.l.s4 1934713408
    %v513 = vunpack.c.0.s8 %v512
    %v514 = vperm.slane %v508, %v513
    %v516 = vunpack.c.l.s4 1934713408
    %v517 = vunpack.c.0.s8 %v516
    %v518 = vperm.slane %v510, %v517
    %v519 = vrot.slane %v490, 4
    %v520 = vsel %vm279, %v519, %v478
    %v521 = vrot.slane %v478, 4
    %v522 = vsel %vm279, %v490, %v521
    %v524 = vunpack.c.l.s4 1934713408
    %v525 = vunpack.c.0.s8 %v524
    %v526 = vperm.slane %v520, %v525
    %v528 = vunpack.c.l.s4 1934713408
    %v529 = vunpack.c.0.s8 %v528
    %v530 = vperm.slane %v522, %v529
    %v531 = vrot.slane %v494, 4
    %v532 = vsel %vm279, %v531, %v482
    %v533 = vrot.slane %v482, 4
    %v534 = vsel %vm279, %v494, %v533
    %v536 = vunpack.c.l.s4 1934713408
    %v537 = vunpack.c.0.s8 %v536
    %v538 = vperm.slane %v532, %v537
    %v540 = vunpack.c.l.s4 1934713408
    %v541 = vunpack.c.0.s8 %v540
    %v542 = vperm.slane %v534, %v541
    %v543 = vrot.slane %v526, 4
    %v544 = vsel %vm279, %v543, %v502
    %v545 = vrot.slane %v502, 4
    %v546 = vsel %vm279, %v526, %v545
    %v547 = vrot.slane %v530, 4
    %v548 = vsel %vm279, %v547, %v506
    %v549 = vrot.slane %v506, 4
    %v550 = vsel %vm279, %v530, %v549
    %v551 = vrot.slane %v538, 4
    %v552 = vsel %vm279, %v551, %v514
    %v553 = vrot.slane %v514, 4
    %v554 = vsel %vm279, %v538, %v553
    %v555 = vrot.slane %v542, 4
    %v556 = vsel %vm279, %v555, %v518
    %v557 = vrot.slane %v518, 4
    %v558 = vsel %vm279, %v542, %v557
    %v559 = vrot.slane %v269, 4
    %v560 = vsel %vm279, %v559, %v257
    %v561 = vrot.slane %v257, 4
    %v562 = vsel %vm279, %v269, %v561
    %v564 = vunpack.c.l.s4 1983009808
    %v565 = vunpack.c.0.s8 %v564
    %v566 = vperm.slane %v560, %v565
    %v568 = vunpack.c.l.s4 1983009808
    %v569 = vunpack.c.0.s8 %v568
    %v570 = vperm.slane %v562, %v569
    %v571 = vrot.slane %v275, 4
    %v572 = vsel %vm279, %v571, %v263
    %v573 = vrot.slane %v263, 4
    %v574 = vsel %vm279, %v275, %v573
    %v576 = vunpack.c.l.s4 1983009808
    %v577 = vunpack.c.0.s8 %v576
    %v578 = vperm.slane %v572, %v577
    %v580 = vunpack.c.l.s4 1983009808
    %v581 = vunpack.c.0.s8 %v580
    %v582 = vperm.slane %v574, %v581
    %v583 = vrot.slane %v578, 4
    %v584 = vsel %vm279, %v583, %v566
    %v585 = vrot.slane %v566, 4
    %v586 = vsel %vm279, %v578, %v585
    %v588 = vunpack.c.l.s4 1934713408
    %v589 = vunpack.c.0.s8 %v588
    %v590 = vperm.slane %v584, %v589
    %v592 = vunpack.c.l.s4 1934713408
    %v593 = vunpack.c.0.s8 %v592
    %v594 = vperm.slane %v586, %v593
    %v595 = vrot.slane %v582, 4
    %v596 = vsel %vm279, %v595, %v570
    %v597 = vrot.slane %v570, 4
    %v598 = vsel %vm279, %v582, %v597
    %v600 = vunpack.c.l.s4 1934713408
    %v601 = vunpack.c.0.s8 %v600
    %v602 = vperm.slane %v596, %v601
    %v604 = vunpack.c.l.s4 1934713408
    %v605 = vunpack.c.0.s8 %v604
    %v606 = vperm.slane %v598, %v605
    %v607 = vrot.slane %v590, 4
    %v608 = vsel %vm279, 0.0, %v607
    %v609 = vrot.slane %v594, 4
    %v610 = vsel %vm279, 0.0, %v609
    %v611 = vrot.slane %v602, 4
    %v612 = vsel %vm279, 0.0, %v611
    %v613 = vrot.slane %v606, 4
    %v614 = vsel %vm279, 0.0, %v613
    %v615 = vrot.slane %v380, 4
    %v616 = vsel %vm279, %v615, %v376
    %v617 = vrot.slane %v376, 4
    %v618 = vsel %vm279, %v380, %v617
    %v620 = vunpack.c.l.s4 1983009808
    %v621 = vunpack.c.0.s8 %v620
    %v622 = vperm.slane %v616, %v621
    %v624 = vunpack.c.l.s4 1983009808
    %v625 = vunpack.c.0.s8 %v624
    %v626 = vperm.slane %v618, %v625
    %v627 = vrot.slane %v382, 4
    %v628 = vsel %vm279, %v627, %v378
    %v629 = vrot.slane %v378, 4
    %v630 = vsel %vm279, %v382, %v629
    %v632 = vunpack.c.l.s4 1983009808
    %v633 = vunpack.c.0.s8 %v632
    %v634 = vperm.slane %v628, %v633
    %v636 = vunpack.c.l.s4 1983009808
    %v637 = vunpack.c.0.s8 %v636
    %v638 = vperm.slane %v630, %v637
    %v639 = vrot.slane %v388, 4
    %v640 = vsel %vm279, %v639, %v384
    %v641 = vrot.slane %v384, 4
    %v642 = vsel %vm279, %v388, %v641
    %v644 = vunpack.c.l.s4 1983009808
    %v645 = vunpack.c.0.s8 %v644
    %v646 = vperm.slane %v640, %v645
    %v648 = vunpack.c.l.s4 1983009808
    %v649 = vunpack.c.0.s8 %v648
    %v650 = vperm.slane %v642, %v649
    %v651 = vrot.slane %v390, 4
    %v652 = vsel %vm279, %v651, %v386
    %v653 = vrot.slane %v386, 4
    %v654 = vsel %vm279, %v390, %v653
    %v656 = vunpack.c.l.s4 1983009808
    %v657 = vunpack.c.0.s8 %v656
    %v658 = vperm.slane %v652, %v657
    %v660 = vunpack.c.l.s4 1983009808
    %v661 = vunpack.c.0.s8 %v660
    %v662 = vperm.slane %v654, %v661
    %v663 = vrot.slane %v634, 4
    %v664 = vsel %vm279, %v663, %v622
    %v665 = vrot.slane %v622, 4
    %v666 = vsel %vm279, %v634, %v665
    %v668 = vunpack.c.l.s4 1934713408
    %v669 = vunpack.c.0.s8 %v668
    %v670 = vperm.slane %v664, %v669
    %v672 = vunpack.c.l.s4 1934713408
    %v673 = vunpack.c.0.s8 %v672
    %v674 = vperm.slane %v666, %v673
    %v675 = vrot.slane %v638, 4
    %v676 = vsel %vm279, %v675, %v626
    %v677 = vrot.slane %v626, 4
    %v678 = vsel %vm279, %v638, %v677
    %v680 = vunpack.c.l.s4 1934713408
    %v681 = vunpack.c.0.s8 %v680
    %v682 = vperm.slane %v676, %v681
    %v684 = vunpack.c.l.s4 1934713408
    %v685 = vunpack.c.0.s8 %v684
    %v686 = vperm.slane %v678, %v685
    %v687 = vrot.slane %v658, 4
    %v688 = vsel %vm279, %v687, %v646
    %v689 = vrot.slane %v646, 4
    %v690 = vsel %vm279, %v658, %v689
    %v692 = vunpack.c.l.s4 1934713408
    %v693 = vunpack.c.0.s8 %v692
    %v694 = vperm.slane %v688, %v693
    %v696 = vunpack.c.l.s4 1934713408
    %v697 = vunpack.c.0.s8 %v696
    %v698 = vperm.slane %v690, %v697
    %v699 = vrot.slane %v662, 4
    %v700 = vsel %vm279, %v699, %v650
    %v701 = vrot.slane %v650, 4
    %v702 = vsel %vm279, %v662, %v701
    %v704 = vunpack.c.l.s4 1934713408
    %v705 = vunpack.c.0.s8 %v704
    %v706 = vperm.slane %v700, %v705
    %v708 = vunpack.c.l.s4 1934713408
    %v709 = vunpack.c.0.s8 %v708
    %v710 = vperm.slane %v702, %v709
    %v711 = vrot.slane %v694, 4
    %v712 = vsel %vm279, %v711, %v670
    %v713 = vrot.slane %v670, 4
    %v714 = vsel %vm279, %v694, %v713
    %v715 = vrot.slane %v698, 4
    %v716 = vsel %vm279, %v715, %v674
    %v717 = vrot.slane %v674, 4
    %v718 = vsel %vm279, %v698, %v717
    %v719 = vrot.slane %v706, 4
    %v720 = vsel %vm279, %v719, %v682
    %v721 = vrot.slane %v682, 4
    %v722 = vsel %vm279, %v706, %v721
    %v723 = vrot.slane %v710, 4
    %v724 = vsel %vm279, %v723, %v686
    %v725 = vrot.slane %v686, 4
    %v726 = vsel %vm279, %v710, %v725
    %v727 = vrot.slane %v548, 4
    %v728 = vsel %vm279, %v727, %v544
    %v729 = vrot.slane %v544, 4
    %v730 = vsel %vm279, %v548, %v729
    %v732 = vunpack.c.l.s4 1983009808
    %v733 = vunpack.c.0.s8 %v732
    %v734 = vperm.slane %v728, %v733
    %v736 = vunpack.c.l.s4 1983009808
    %v737 = vunpack.c.0.s8 %v736
    %v738 = vperm.slane %v730, %v737
    %v739 = vrot.slane %v550, 4
    %v740 = vsel %vm279, %v739, %v546
    %v741 = vrot.slane %v546, 4
    %v742 = vsel %vm279, %v550, %v741
    %v744 = vunpack.c.l.s4 1983009808
    %v745 = vunpack.c.0.s8 %v744
    %v746 = vperm.slane %v740, %v745
    %v748 = vunpack.c.l.s4 1983009808
    %v749 = vunpack.c.0.s8 %v748
    %v750 = vperm.slane %v742, %v749
    %v751 = vrot.slane %v556, 4
    %v752 = vsel %vm279, %v751, %v552
    %v753 = vrot.slane %v552, 4
    %v754 = vsel %vm279, %v556, %v753
    %v756 = vunpack.c.l.s4 1983009808
    %v757 = vunpack.c.0.s8 %v756
    %v758 = vperm.slane %v752, %v757
    %v760 = vunpack.c.l.s4 1983009808
    %v761 = vunpack.c.0.s8 %v760
    %v762 = vperm.slane %v754, %v761
    %v763 = vrot.slane %v558, 4
    %v764 = vsel %vm279, %v763, %v554
    %v765 = vrot.slane %v554, 4
    %v766 = vsel %vm279, %v558, %v765
    %v768 = vunpack.c.l.s4 1983009808
    %v769 = vunpack.c.0.s8 %v768
    %v770 = vperm.slane %v764, %v769
    %v772 = vunpack.c.l.s4 1983009808
    %v773 = vunpack.c.0.s8 %v772
    %v774 = vperm.slane %v766, %v773
    %v775 = vrot.slane %v746, 4
    %v776 = vsel %vm279, %v775, %v734
    %v777 = vrot.slane %v734, 4
    %v778 = vsel %vm279, %v746, %v777
    %v780 = vunpack.c.l.s4 1934713408
    %v781 = vunpack.c.0.s8 %v780
    %v782 = vperm.slane %v776, %v781
    %v784 = vunpack.c.l.s4 1934713408
    %v785 = vunpack.c.0.s8 %v784
    %v786 = vperm.slane %v778, %v785
    %v787 = vrot.slane %v750, 4
    %v788 = vsel %vm279, %v787, %v738
    %v789 = vrot.slane %v738, 4
    %v790 = vsel %vm279, %v750, %v789
    %v792 = vunpack.c.l.s4 1934713408
    %v793 = vunpack.c.0.s8 %v792
    %v794 = vperm.slane %v788, %v793
    %v796 = vunpack.c.l.s4 1934713408
    %v797 = vunpack.c.0.s8 %v796
    %v798 = vperm.slane %v790, %v797
    %v799 = vrot.slane %v770, 4
    %v800 = vsel %vm279, %v799, %v758
    %v801 = vrot.slane %v758, 4
    %v802 = vsel %vm279, %v770, %v801
    %v804 = vunpack.c.l.s4 1934713408
    %v805 = vunpack.c.0.s8 %v804
    %v806 = vperm.slane %v800, %v805
    %v808 = vunpack.c.l.s4 1934713408
    %v809 = vunpack.c.0.s8 %v808
    %v810 = vperm.slane %v802, %v809
    %v811 = vrot.slane %v774, 4
    %v812 = vsel %vm279, %v811, %v762
    %v813 = vrot.slane %v762, 4
    %v814 = vsel %vm279, %v774, %v813
    %v816 = vunpack.c.l.s4 1934713408
    %v817 = vunpack.c.0.s8 %v816
    %v818 = vperm.slane %v812, %v817
    %v820 = vunpack.c.l.s4 1934713408
    %v821 = vunpack.c.0.s8 %v820
    %v822 = vperm.slane %v814, %v821
    %v823 = vrot.slane %v806, 4
    %v824 = vsel %vm279, %v823, %v782
    %v825 = vrot.slane %v782, 4
    %v826 = vsel %vm279, %v806, %v825
    %v827 = vrot.slane %v810, 4
    %v828 = vsel %vm279, %v827, %v786
    %v829 = vrot.slane %v786, 4
    %v830 = vsel %vm279, %v810, %v829
    %v831 = vrot.slane %v818, 4
    %v832 = vsel %vm279, %v831, %v794
    %v833 = vrot.slane %v794, 4
    %v834 = vsel %vm279, %v818, %v833
    %v835 = vrot.slane %v822, 4
    %v836 = vsel %vm279, %v835, %v798
    %v837 = vrot.slane %v798, 4
    %v838 = vsel %vm279, %v822, %v837
    %v839 = vsel %vm279, %v441, %v422
    %v841 = vunpack.c.l.s4 1983009808
    %v842 = vunpack.c.0.s8 %v841
    %v843 = vperm.slane %v839, %v842
    %v844 = vrot.slane %v442, 4
    %v845 = vsel %vm279, %v844, %v440
    %v847 = vunpack.c.l.s4 1983009808
    %v848 = vunpack.c.0.s8 %v847
    %v849 = vperm.slane %v845, %v848
    %v850 = vsel %vm279, %v445, %v434
    %v852 = vunpack.c.l.s4 1983009808
    %v853 = vunpack.c.0.s8 %v852
    %v854 = vperm.slane %v850, %v853
    %v855 = vrot.slane %v446, 4
    %v856 = vsel %vm279, %v855, %v444
    %v858 = vunpack.c.l.s4 1983009808
    %v859 = vunpack.c.0.s8 %v858
    %v860 = vperm.slane %v856, %v859
    %v861 = vrot.slane %v849, 4
    %v862 = vsel %vm279, %v861, %v843
    %v863 = vrot.slane %v843, 4
    %v864 = vsel %vm279, %v849, %v863
    %v866 = vunpack.c.l.s4 1934713408
    %v867 = vunpack.c.0.s8 %v866
    %v868 = vperm.slane %v862, %v867
    %v870 = vunpack.c.l.s4 1934713408
    %v871 = vunpack.c.0.s8 %v870
    %v872 = vperm.slane %v864, %v871
    %v873 = vrot.slane %v860, 4
    %v874 = vsel %vm279, %v873, %v854
    %v875 = vrot.slane %v854, 4
    %v876 = vsel %vm279, %v860, %v875
    %v878 = vunpack.c.l.s4 1934713408
    %v879 = vunpack.c.0.s8 %v878
    %v880 = vperm.slane %v874, %v879
    %v882 = vunpack.c.l.s4 1934713408
    %v883 = vunpack.c.0.s8 %v882
    %v884 = vperm.slane %v876, %v883
    %v885 = vrot.slane %v880, 4
    %v886 = vsel %vm279, %v885, %v868
    %v887 = vrot.slane %v868, 4
    %v888 = vsel %vm279, %v880, %v887
    %v889 = vrot.slane %v884, 4
    %v890 = vsel %vm279, %v889, %v872
    %v891 = vrot.slane %v872, 4
    %v892 = vsel %vm279, %v884, %v891
    %v893 = vsel %vm279, %v609, %v590
    %v895 = vunpack.c.l.s4 1983009808
    %v896 = vunpack.c.0.s8 %v895
    %v897 = vperm.slane %v893, %v896
    %v898 = vrot.slane %v610, 4
    %v899 = vsel %vm279, %v898, %v608
    %v901 = vunpack.c.l.s4 1983009808
    %v902 = vunpack.c.0.s8 %v901
    %v903 = vperm.slane %v899, %v902
    %v904 = vsel %vm279, %v613, %v602
    %v906 = vunpack.c.l.s4 1983009808
    %v907 = vunpack.c.0.s8 %v906
    %v908 = vperm.slane %v904, %v907
    %v909 = vrot.slane %v614, 4
    %v910 = vsel %vm279, %v909, %v612
    %v912 = vunpack.c.l.s4 1983009808
    %v913 = vunpack.c.0.s8 %v912
    %v914 = vperm.slane %v910, %v913
    %v915 = vrot.slane %v903, 4
    %v916 = vsel %vm279, %v915, %v897
    %v917 = vrot.slane %v897, 4
    %v918 = vsel %vm279, %v903, %v917
    %v920 = vunpack.c.l.s4 1934713408
    %v921 = vunpack.c.0.s8 %v920
    %v922 = vperm.slane %v916, %v921
    %v924 = vunpack.c.l.s4 1934713408
    %v925 = vunpack.c.0.s8 %v924
    %v926 = vperm.slane %v918, %v925
    %v927 = vrot.slane %v914, 4
    %v928 = vsel %vm279, %v927, %v908
    %v929 = vrot.slane %v908, 4
    %v930 = vsel %vm279, %v914, %v929
    %v932 = vunpack.c.l.s4 1934713408
    %v933 = vunpack.c.0.s8 %v932
    %v934 = vperm.slane %v928, %v933
    %v936 = vunpack.c.l.s4 1934713408
    %v937 = vunpack.c.0.s8 %v936
    %v938 = vperm.slane %v930, %v937
    %v939 = vrot.slane %v934, 4
    %v940 = vsel %vm279, %v939, %v922
    %v941 = vrot.slane %v922, 4
    %v942 = vsel %vm279, %v934, %v941
    %v943 = vrot.slane %v938, 4
    %v944 = vsel %vm279, %v943, %v926
    %v945 = vrot.slane %v926, 4
    %v946 = vsel %vm279, %v938, %v945
    %v947 = vmul.f32 %v712, 0.35355338
    %v948 = vmul.f32 %v824, 0.35355338
    %v949 = vmul.f32 %v714, 0.35355338
    %v950 = vmul.f32 %v826, 0.35355338
    %v951 = vmul.f32 %v716, 0.35355338
    %v952 = vmul.f32 %v828, 0.35355338
    %v953 = vmul.f32 %v718, 0.35355338
    %v954 = vmul.f32 %v830, 0.35355338
    %v955 = vld [vmem:[#allocation5] sm:$0xff]
    %vm956 = vcmask 64512
    %v958 = vsel %vm956, %v947, 0
    %v961 = vsel %vm956, %v720, 0
    %963 = vmatpush.xpose.msra.mxu0 0.0
    %964 = vmatpush.xpose.msra.mxu0 0.0
    %965 = vmatpush.xpose.msra.mxu0 0.0
    %966 = vmatpush.xpose.msra.mxu0 0.0
    %967 = vmatpush.xpose.msra.mxu0 0.0
    %968 = vmatpush.xpose.msra.mxu0 0.0
    %969 = vmatpush.xpose.msra.mxu0 0.0
    %970 = vmatpush.xpose.msra.mxu0 0.0
    %971 = vmatpush.xpose.msra.mxu0 0.0
    %972 = vmatpush.xpose.msra.mxu0 0.0
    %973 = vmatpush.xpose.msra.mxu0 0.0
    %974 = vmatpush.xpose.msra.mxu0 0.0
    %975 = vmatpush.xpose.msra.mxu0 0.0
    %976 = vmatpush.xpose.msra.mxu0 0.0
    %977 = vmatpush.xpose.msra.mxu0 0.0
    %978 = vmatpush.xpose.msra.mxu0 %v961
    %979 = vmatmul.f32.gmra.mxu0 %v958
    %v980 = vpop.f32.mrf.mxu0
    %v981 = vadd.f32 %v955, %v980
    %982 = vdwg.mxu0
    %v984 = vsel %vm956, %v948, 0
    %v987 = vsel %vm956, %v832, 0
    %989 = vmatpush.xpose.msra.mxu0 0.0
    %990 = vmatpush.xpose.msra.mxu0 0.0
    %991 = vmatpush.xpose.msra.mxu0 0.0
    %992 = vmatpush.xpose.msra.mxu0 0.0
    %993 = vmatpush.xpose.msra.mxu0 0.0
    %994 = vmatpush.xpose.msra.mxu0 0.0
    %995 = vmatpush.xpose.msra.mxu0 0.0
    %996 = vmatpush.xpose.msra.mxu0 0.0
    %997 = vmatpush.xpose.msra.mxu0 0.0
    %998 = vmatpush.xpose.msra.mxu0 0.0
    %999 = vmatpush.xpose.msra.mxu0 0.0
    %1000 = vmatpush.xpose.msra.mxu0 0.0
    %1001 = vmatpush.xpose.msra.mxu0 0.0
    %1002 = vmatpush.xpose.msra.mxu0 0.0
    %1003 = vmatpush.xpose.msra.mxu0 0.0
    %1004 = vmatpush.xpose.msra.mxu0 %v987
    %1005 = vmatmul.f32.gmra.mxu0 %v984
    %v1006 = vpop.f32.mrf.mxu0
    %v1007 = vadd.f32 %v955, %v1006
    %1008 = vdwg.mxu0
    %v1010 = vsel %vm956, %v949, 0
    %v1013 = vsel %vm956, %v722, 0
    %1015 = vmatpush.xpose.msra.mxu0 0.0
    %1016 = vmatpush.xpose.msra.mxu0 0.0
    %1017 = vmatpush.xpose.msra.mxu0 0.0
    %1018 = vmatpush.xpose.msra.mxu0 0.0
    %1019 = vmatpush.xpose.msra.mxu0 0.0
    %1020 = vmatpush.xpose.msra.mxu0 0.0
    %1021 = vmatpush.xpose.msra.mxu0 0.0
    %1022 = vmatpush.xpose.msra.mxu0 0.0
    %1023 = vmatpush.xpose.msra.mxu0 0.0
    %1024 = vmatpush.xpose.msra.mxu0 0.0
    %1025 = vmatpush.xpose.msra.mxu0 0.0
    %1026 = vmatpush.xpose.msra.mxu0 0.0
    %1027 = vmatpush.xpose.msra.mxu0 0.0
    %1028 = vmatpush.xpose.msra.mxu0 0.0
    %1029 = vmatpush.xpose.msra.mxu0 0.0
    %1030 = vmatpush.xpose.msra.mxu0 %v1013
    %1031 = vmatmul.f32.gmra.mxu0 %v1010
    %v1032 = vpop.f32.mrf.mxu0
    %v1033 = vadd.f32 %v955, %v1032
    %1034 = vdwg.mxu0
    %v1036 = vsel %vm956, %v950, 0
    %v1039 = vsel %vm956, %v834, 0
    %1041 = vmatpush.xpose.msra.mxu0 0.0
    %1042 = vmatpush.xpose.msra.mxu0 0.0
    %1043 = vmatpush.xpose.msra.mxu0 0.0
    %1044 = vmatpush.xpose.msra.mxu0 0.0
    %1045 = vmatpush.xpose.msra.mxu0 0.0
    %1046 = vmatpush.xpose.msra.mxu0 0.0
    %1047 = vmatpush.xpose.msra.mxu0 0.0
    %1048 = vmatpush.xpose.msra.mxu0 0.0
    %1049 = vmatpush.xpose.msra.mxu0 0.0
    %1050 = vmatpush.xpose.msra.mxu0 0.0
    %1051 = vmatpush.xpose.msra.mxu0 0.0
    %1052 = vmatpush.xpose.msra.mxu0 0.0
    %1053 = vmatpush.xpose.msra.mxu0 0.0
    %1054 = vmatpush.xpose.msra.mxu0 0.0
    %1055 = vmatpush.xpose.msra.mxu0 0.0
    %1056 = vmatpush.xpose.msra.mxu0 %v1039
    %1057 = vmatmul.f32.gmra.mxu0 %v1036
    %v1058 = vpop.f32.mrf.mxu0
    %v1059 = vadd.f32 %v955, %v1058
    %1060 = vdwg.mxu0
    %v1062 = vsel %vm956, %v951, 0
    %v1065 = vsel %vm956, %v724, 0
    %1067 = vmatpush.xpose.msra.mxu0 0.0
    %1068 = vmatpush.xpose.msra.mxu0 0.0
    %1069 = vmatpush.xpose.msra.mxu0 0.0
    %1070 = vmatpush.xpose.msra.mxu0 0.0
    %1071 = vmatpush.xpose.msra.mxu0 0.0
    %1072 = vmatpush.xpose.msra.mxu0 0.0
    %1073 = vmatpush.xpose.msra.mxu0 0.0
    %1074 = vmatpush.xpose.msra.mxu0 0.0
    %1075 = vmatpush.xpose.msra.mxu0 0.0
    %1076 = vmatpush.xpose.msra.mxu0 0.0
    %1077 = vmatpush.xpose.msra.mxu0 0.0
    %1078 = vmatpush.xpose.msra.mxu0 0.0
    %1079 = vmatpush.xpose.msra.mxu0 0.0
    %1080 = vmatpush.xpose.msra.mxu0 0.0
    %1081 = vmatpush.xpose.msra.mxu0 0.0
    %1082 = vmatpush.xpose.msra.mxu0 %v1065
    %1083 = vmatmul.f32.gmra.mxu0 %v1062
    %v1084 = vpop.f32.mrf.mxu0
    %v1085 = vadd.f32 %v955, %v1084
    %1086 = vdwg.mxu0
    %v1088 = vsel %vm956, %v952, 0
    %v1091 = vsel %vm956, %v836, 0
    %1093 = vmatpush.xpose.msra.mxu0 0.0
    %1094 = vmatpush.xpose.msra.mxu0 0.0
    %1095 = vmatpush.xpose.msra.mxu0 0.0
    %1096 = vmatpush.xpose.msra.mxu0 0.0
    %1097 = vmatpush.xpose.msra.mxu0 0.0
    %1098 = vmatpush.xpose.msra.mxu0 0.0
    %1099 = vmatpush.xpose.msra.mxu0 0.0
    %1100 = vmatpush.xpose.msra.mxu0 0.0
    %1101 = vmatpush.xpose.msra.mxu0 0.0
    %1102 = vmatpush.xpose.msra.mxu0 0.0
    %1103 = vmatpush.xpose.msra.mxu0 0.0
    %1104 = vmatpush.xpose.msra.mxu0 0.0
    %1105 = vmatpush.xpose.msra.mxu0 0.0
    %1106 = vmatpush.xpose.msra.mxu0 0.0
    %1107 = vmatpush.xpose.msra.mxu0 0.0
    %1108 = vmatpush.xpose.msra.mxu0 %v1091
    %1109 = vmatmul.f32.gmra.mxu0 %v1088
    %v1110 = vpop.f32.mrf.mxu0
    %v1111 = vadd.f32 %v955, %v1110
    %1112 = vdwg.mxu0
    %v1114 = vsel %vm956, %v953, 0
    %v1117 = vsel %vm956, %v726, 0
    %1119 = vmatpush.xpose.msra.mxu0 0.0
    %1120 = vmatpush.xpose.msra.mxu0 0.0
    %1121 = vmatpush.xpose.msra.mxu0 0.0
    %1122 = vmatpush.xpose.msra.mxu0 0.0
    %1123 = vmatpush.xpose.msra.mxu0 0.0
    %1124 = vmatpush.xpose.msra.mxu0 0.0
    %1125 = vmatpush.xpose.msra.mxu0 0.0
    %1126 = vmatpush.xpose.msra.mxu0 0.0
    %1127 = vmatpush.xpose.msra.mxu0 0.0
    %1128 = vmatpush.xpose.msra.mxu0 0.0
    %1129 = vmatpush.xpose.msra.mxu0 0.0
    %1130 = vmatpush.xpose.msra.mxu0 0.0
    %1131 = vmatpush.xpose.msra.mxu0 0.0
    %1132 = vmatpush.xpose.msra.mxu0 0.0
    %1133 = vmatpush.xpose.msra.mxu0 0.0
    %1134 = vmatpush.xpose.msra.mxu0 %v1117
    %1135 = vmatmul.f32.gmra.mxu0 %v1114
    %v1136 = vpop.f32.mrf.mxu0
    %v1137 = vadd.f32 %v955, %v1136
    %1138 = vdwg.mxu0
    %v1140 = vsel %vm956, %v954, 0
    %v1143 = vsel %vm956, %v838, 0
    %1145 = vmatpush.xpose.msra.mxu0 0.0
    %1146 = vmatpush.xpose.msra.mxu0 0.0
    %1147 = vmatpush.xpose.msra.mxu0 0.0
    %1148 = vmatpush.xpose.msra.mxu0 0.0
    %1149 = vmatpush.xpose.msra.mxu0 0.0
    %1150 = vmatpush.xpose.msra.mxu0 0.0
    %1151 = vmatpush.xpose.msra.mxu0 0.0
    %1152 = vmatpush.xpose.msra.mxu0 0.0
    %1153 = vmatpush.xpose.msra.mxu0 0.0
    %1154 = vmatpush.xpose.msra.mxu0 0.0
    %1155 = vmatpush.xpose.msra.mxu0 0.0
    %1156 = vmatpush.xpose.msra.mxu0 0.0
    %1157 = vmatpush.xpose.msra.mxu0 0.0
    %1158 = vmatpush.xpose.msra.mxu0 0.0
    %1159 = vmatpush.xpose.msra.mxu0 0.0
    %1160 = vmatpush.xpose.msra.mxu0 %v1143
    %1161 = vmatmul.f32.gmra.mxu0 %v1140
    %v1162 = vpop.f32.mrf.mxu0
    %v1163 = vadd.f32 %v955, %v1162
    %1164 = vdwg.mxu0
    %v1165 = vsel %vm956, %v981, -inf
    %1166 = vmax.xlane.f32.xlu0 %v1165
    %v1167 = vpop.xlane.xlu0 %1166
    %v1168 = vsel %vm956, %v1007, -inf
    %1169 = vmax.xlane.f32.xlu0 %v1168
    %v1170 = vpop.xlane.xlu0 %1169
    %v1171 = vsel %vm956, %v1033, -inf
    %1172 = vmax.xlane.f32.xlu0 %v1171
    %v1173 = vpop.xlane.xlu0 %1172
    %v1174 = vsel %vm956, %v1059, -inf
    %1175 = vmax.xlane.f32.xlu0 %v1174
    %v1176 = vpop.xlane.xlu0 %1175
    %v1177 = vsel %vm956, %v1085, -inf
    %1178 = vmax.xlane.f32.xlu0 %v1177
    %v1179 = vpop.xlane.xlu0 %1178
    %v1180 = vsel %vm956, %v1111, -inf
    %1181 = vmax.xlane.f32.xlu0 %v1180
    %v1182 = vpop.xlane.xlu0 %1181
    %v1183 = vsel %vm956, %v1137, -inf
    %1184 = vmax.xlane.f32.xlu0 %v1183
    %v1185 = vpop.xlane.xlu0 %1184
    %v1186 = vsel %vm956, %v1163, -inf
    %1187 = vmax.xlane.f32.xlu0 %v1186
    %v1188 = vpop.xlane.xlu0 %1187
    %v1189 = vsub.f32 %v981, %v1167
    %v1190 = vsub.f32 %v1007, %v1170
    %v1191 = vsub.f32 %v1033, %v1173
    %v1192 = vsub.f32 %v1059, %v1176
    %v1193 = vsub.f32 %v1085, %v1179
    %v1194 = vsub.f32 %v1111, %v1182
    %v1195 = vsub.f32 %v1137, %v1185
    %v1196 = vsub.f32 %v1163, %v1188
    %v1197 = vmul.f32 %v1189, 1.442695
    %v1198 = vpow.pop %v1197
    %v1199 = vmul.f32 %v1190, 1.442695
    %v1200 = vpow.pop %v1199
    %v1201 = vmul.f32 %v1191, 1.442695
    %v1202 = vpow.pop %v1201
    %v1203 = vmul.f32 %v1192, 1.442695
    %v1204 = vpow.pop %v1203
    %v1205 = vmul.f32 %v1193, 1.442695
    %v1206 = vpow.pop %v1205
    %v1207 = vmul.f32 %v1194, 1.442695
    %v1208 = vpow.pop %v1207
    %v1209 = vmul.f32 %v1195, 1.442695
    %v1210 = vpow.pop %v1209
    %v1211 = vmul.f32 %v1196, 1.442695
    %v1212 = vpow.pop %v1211
    %v1213 = vsel %vm956, %v1198, 0.0
    %1214 = vadd.xlane.f32.xlu0 %v1213
    %v1215 = vpop.xlane.xlu0 %1214
    %v1216 = vsel %vm956, %v1200, 0.0
    %1217 = vadd.xlane.f32.xlu0 %v1216
    %v1218 = vpop.xlane.xlu0 %1217
    %v1219 = vsel %vm956, %v1202, 0.0
    %1220 = vadd.xlane.f32.xlu0 %v1219
    %v1221 = vpop.xlane.xlu0 %1220
    %v1222 = vsel %vm956, %v1204, 0.0
    %1223 = vadd.xlane.f32.xlu0 %v1222
    %v1224 = vpop.xlane.xlu0 %1223
    %v1225 = vsel %vm956, %v1206, 0.0
    %1226 = vadd.xlane.f32.xlu0 %v1225
    %v1227 = vpop.xlane.xlu0 %1226
    %v1228 = vsel %vm956, %v1208, 0.0
    %1229 = vadd.xlane.f32.xlu0 %v1228
    %v1230 = vpop.xlane.xlu0 %1229
    %v1231 = vsel %vm956, %v1210, 0.0
    %1232 = vadd.xlane.f32.xlu0 %v1231
    %v1233 = vpop.xlane.xlu0 %1232
    %v1234 = vsel %vm956, %v1212, 0.0
    %1235 = vadd.xlane.f32.xlu0 %v1234
    %v1236 = vpop.xlane.xlu0 %1235
    %v1238 = vsel %vm956, %v1198, 0
    %1240 = vmatpush.msra.mxu0 0.0
    %1241 = vmatpush.msra.mxu0 0.0
    %1242 = vmatpush.msra.mxu0 0.0
    %1243 = vmatpush.msra.mxu0 0.0
    %1244 = vmatpush.msra.mxu0 0.0
    %1245 = vmatpush.msra.mxu0 0.0
    %1246 = vmatpush.msra.mxu0 0.0
    %1247 = vmatpush.msra.mxu0 0.0
    %1248 = vmatpush.msra.mxu0 0.0
    %1249 = vmatpush.msra.mxu0 0.0
    %1250 = vmatpush.msra.mxu0 0.0
    %1251 = vmatpush.msra.mxu0 0.0
    %1252 = vmatpush.msra.mxu0 0.0
    %1253 = vmatpush.msra.mxu0 0.0
    %1254 = vmatpush.msra.mxu0 0.0
    %1255 = vmatpush.msra.mxu0 %v886
    %1256 = vmatmul.f32.gmra.mxu0 %v1238
    %v1257 = vpop.f32.mrf.mxu0
    %v1258 = vadd.f32 0.0, %v1257
    %1259 = vdwg.mxu0
    %v1261 = vsel %vm956, %v1200, 0
    %1263 = vmatpush.msra.mxu0 0.0
    %1264 = vmatpush.msra.mxu0 0.0
    %1265 = vmatpush.msra.mxu0 0.0
    %1266 = vmatpush.msra.mxu0 0.0
    %1267 = vmatpush.msra.mxu0 0.0
    %1268 = vmatpush.msra.mxu0 0.0
    %1269 = vmatpush.msra.mxu0 0.0
    %1270 = vmatpush.msra.mxu0 0.0
    %1271 = vmatpush.msra.mxu0 0.0
    %1272 = vmatpush.msra.mxu0 0.0
    %1273 = vmatpush.msra.mxu0 0.0
    %1274 = vmatpush.msra.mxu0 0.0
    %1275 = vmatpush.msra.mxu0 0.0
    %1276 = vmatpush.msra.mxu0 0.0
    %1277 = vmatpush.msra.mxu0 0.0
    %1278 = vmatpush.msra.mxu0 %v940
    %1279 = vmatmul.f32.gmra.mxu0 %v1261
    %v1280 = vpop.f32.mrf.mxu0
    %v1281 = vadd.f32 0.0, %v1280
    %1282 = vdwg.mxu0
    %v1284 = vsel %vm956, %v1202, 0
    %1286 = vmatpush.msra.mxu0 0.0
    %1287 = vmatpush.msra.mxu0 0.0
    %1288 = vmatpush.msra.mxu0 0.0
    %1289 = vmatpush.msra.mxu0 0.0
    %1290 = vmatpush.msra.mxu0 0.0
    %1291 = vmatpush.msra.mxu0 0.0
    %1292 = vmatpush.msra.mxu0 0.0
    %1293 = vmatpush.msra.mxu0 0.0
    %1294 = vmatpush.msra.mxu0 0.0
    %1295 = vmatpush.msra.mxu0 0.0
    %1296 = vmatpush.msra.mxu0 0.0
    %1297 = vmatpush.msra.mxu0 0.0
    %1298 = vmatpush.msra.mxu0 0.0
    %1299 = vmatpush.msra.mxu0 0.0
    %1300 = vmatpush.msra.mxu0 0.0
    %1301 = vmatpush.msra.mxu0 %v888
    %1302 = vmatmul.f32.gmra.mxu0 %v1284
    %v1303 = vpop.f32.mrf.mxu0
    %v1304 = vadd.f32 0.0, %v1303
    %1305 = vdwg.mxu0
    %v1307 = vsel %vm956, %v1204, 0
    %1309 = vmatpush.msra.mxu0 0.0
    %1310 = vmatpush.msra.mxu0 0.0
    %1311 = vmatpush.msra.mxu0 0.0
    %1312 = vmatpush.msra.mxu0 0.0
    %1313 = vmatpush.msra.mxu0 0.0
    %1314 = vmatpush.msra.mxu0 0.0
    %1315 = vmatpush.msra.mxu0 0.0
    %1316 = vmatpush.msra.mxu0 0.0
    %1317 = vmatpush.msra.mxu0 0.0
    %1318 = vmatpush.msra.mxu0 0.0
    %1319 = vmatpush.msra.mxu0 0.0
    %1320 = vmatpush.msra.mxu0 0.0
    %1321 = vmatpush.msra.mxu0 0.0
    %1322 = vmatpush.msra.mxu0 0.0
    %1323 = vmatpush.msra.mxu0 0.0
    %1324 = vmatpush.msra.mxu0 %v942
    %1325 = vmatmul.f32.gmra.mxu0 %v1307
    %v1326 = vpop.f32.mrf.mxu0
    %v1327 = vadd.f32 0.0, %v1326
    %1328 = vdwg.mxu0
    %v1330 = vsel %vm956, %v1206, 0
    %1332 = vmatpush.msra.mxu0 0.0
    %1333 = vmatpush.msra.mxu0 0.0
    %1334 = vmatpush.msra.mxu0 0.0
    %1335 = vmatpush.msra.mxu0 0.0
    %1336 = vmatpush.msra.mxu0 0.0
    %1337 = vmatpush.msra.mxu0 0.0
    %1338 = vmatpush.msra.mxu0 0.0
    %1339 = vmatpush.msra.mxu0 0.0
    %1340 = vmatpush.msra.mxu0 0.0
    %1341 = vmatpush.msra.mxu0 0.0
    %1342 = vmatpush.msra.mxu0 0.0
    %1343 = vmatpush.msra.mxu0 0.0
    %1344 = vmatpush.msra.mxu0 0.0
    %1345 = vmatpush.msra.mxu0 0.0
    %1346 = vmatpush.msra.mxu0 0.0
    %1347 = vmatpush.msra.mxu0 %v890
    %1348 = vmatmul.f32.gmra.mxu0 %v1330
    %v1349 = vpop.f32.mrf.mxu0
    %v1350 = vadd.f32 0.0, %v1349
    %1351 = vdwg.mxu0
    %v1353 = vsel %vm956, %v1208, 0
    %1355 = vmatpush.msra.mxu0 0.0
    %1356 = vmatpush.msra.mxu0 0.0
    %1357 = vmatpush.msra.mxu0 0.0
    %1358 = vmatpush.msra.mxu0 0.0
    %1359 = vmatpush.msra.mxu0 0.0
    %1360 = vmatpush.msra.mxu0 0.0
    %1361 = vmatpush.msra.mxu0 0.0
    %1362 = vmatpush.msra.mxu0 0.0
    %1363 = vmatpush.msra.mxu0 0.0
    %1364 = vmatpush.msra.mxu0 0.0
    %1365 = vmatpush.msra.mxu0 0.0
    %1366 = vmatpush.msra.mxu0 0.0
    %1367 = vmatpush.msra.mxu0 0.0
    %1368 = vmatpush.msra.mxu0 0.0
    %1369 = vmatpush.msra.mxu0 0.0
    %1370 = vmatpush.msra.mxu0 %v944
    %1371 = vmatmul.f32.gmra.mxu0 %v1353
    %v1372 = vpop.f32.mrf.mxu0
    %v1373 = vadd.f32 0.0, %v1372
    %1374 = vdwg.mxu0
    %v1376 = vsel %vm956, %v1210, 0
    %1378 = vmatpush.msra.mxu0 0.0
    %1379 = vmatpush.msra.mxu0 0.0
    %1380 = vmatpush.msra.mxu0 0.0
    %1381 = vmatpush.msra.mxu0 0.0
    %1382 = vmatpush.msra.mxu0 0.0
    %1383 = vmatpush.msra.mxu0 0.0
    %1384 = vmatpush.msra.mxu0 0.0
    %1385 = vmatpush.msra.mxu0 0.0
    %1386 = vmatpush.msra.mxu0 0.0
    %1387 = vmatpush.msra.mxu0 0.0
    %1388 = vmatpush.msra.mxu0 0.0
    %1389 = vmatpush.msra.mxu0 0.0
    %1390 = vmatpush.msra.mxu0 0.0
    %1391 = vmatpush.msra.mxu0 0.0
    %1392 = vmatpush.msra.mxu0 0.0
    %1393 = vmatpush.msra.mxu0 %v892
    %1394 = vmatmul.f32.gmra.mxu0 %v1376
    %v1395 = vpop.f32.mrf.mxu0
    %v1396 = vadd.f32 0.0, %v1395
    %1397 = vdwg.mxu0
    %v1399 = vsel %vm956, %v1212, 0
    %1401 = vmatpush.msra.mxu0 0.0
    %1402 = vmatpush.msra.mxu0 0.0
    %1403 = vmatpush.msra.mxu0 0.0
    %1404 = vmatpush.msra.mxu0 0.0
    %1405 = vmatpush.msra.mxu0 0.0
    %1406 = vmatpush.msra.mxu0 0.0
    %1407 = vmatpush.msra.mxu0 0.0
    %1408 = vmatpush.msra.mxu0 0.0
    %1409 = vmatpush.msra.mxu0 0.0
    %1410 = vmatpush.msra.mxu0 0.0
    %1411 = vmatpush.msra.mxu0 0.0
    %1412 = vmatpush.msra.mxu0 0.0
    %1413 = vmatpush.msra.mxu0 0.0
    %1414 = vmatpush.msra.mxu0 0.0
    %1415 = vmatpush.msra.mxu0 0.0
    %1416 = vmatpush.msra.mxu0 %v946
    %1417 = vmatmul.f32.gmra.mxu0 %v1399
    %v1418 = vpop.f32.mrf.mxu0
    %v1419 = vadd.f32 0.0, %v1418
    %1420 = vdwg.mxu0
    %v1421 = vrcp.pop %v1215
    %v1422 = vrcp.pop %v1218
    %v1423 = vrcp.pop %v1221
    %v1424 = vrcp.pop %v1224
    %v1425 = vrcp.pop %v1227
    %v1426 = vrcp.pop %v1230
    %v1427 = vrcp.pop %v1233
    %v1428 = vrcp.pop %v1236
    %v1429 = vmul.f32 %v1258, %v1421
    %v1430 = vmul.f32 %v1281, %v1422
    %v1431 = vmul.f32 %v1304, %v1423
    %v1432 = vmul.f32 %v1327, %v1424
    %v1433 = vmul.f32 %v1350, %v1425
    %v1434 = vmul.f32 %v1373, %v1426
    %v1435 = vmul.f32 %v1396, %v1427
    %v1436 = vmul.f32 %v1419, %v1428
    %v1437 = vrot.slane %v1433, 4
    %v1438 = vsel %vm279, %v1437, %v1429
    %v1439 = vrot.slane %v1429, 4
    %v1440 = vsel %vm279, %v1433, %v1439
    %v1442 = vunpack.c.l.s4 1983009808
    %v1443 = vunpack.c.0.s8 %v1442
    %v1444 = vperm.slane %v1438, %v1443
    %v1446 = vunpack.c.l.s4 1983009808
    %v1447 = vunpack.c.0.s8 %v1446
    %v1448 = vperm.slane %v1440, %v1447
    %v1449 = vrot.slane %v1435, 4
    %v1450 = vsel %vm279, %v1449, %v1431
    %v1451 = vrot.slane %v1431, 4
    %v1452 = vsel %vm279, %v1435, %v1451
    %v1454 = vunpack.c.l.s4 1983009808
    %v1455 = vunpack.c.0.s8 %v1454
    %v1456 = vperm.slane %v1450, %v1455
    %v1458 = vunpack.c.l.s4 1983009808
    %v1459 = vunpack.c.0.s8 %v1458
    %v1460 = vperm.slane %v1452, %v1459
    %v1461 = vrot.slane %v1456, 4
    %v1462 = vsel %vm279, %v1461, %v1444
    %v1463 = vrot.slane %v1444, 4
    %v1464 = vsel %vm279, %v1456, %v1463
    %v1466 = vunpack.c.l.s4 1934713408
    %v1467 = vunpack.c.0.s8 %v1466
    %v1468 = vperm.slane %v1462, %v1467
    %v1470 = vunpack.c.l.s4 1934713408
    %v1471 = vunpack.c.0.s8 %v1470
    %v1472 = vperm.slane %v1464, %v1471
    %v1473 = vrot.slane %v1460, 4
    %v1474 = vsel %vm279, %v1473, %v1448
    %v1475 = vrot.slane %v1448, 4
    %v1476 = vsel %vm279, %v1460, %v1475
    %v1478 = vunpack.c.l.s4 1934713408
    %v1479 = vunpack.c.0.s8 %v1478
    %v1480 = vperm.slane %v1474, %v1479
    %v1482 = vunpack.c.l.s4 1934713408
    %v1483 = vunpack.c.0.s8 %v1482
    %v1484 = vperm.slane %v1476, %v1483
    %v1485 = vrot.slane %v1468, 4
    %v1486 = vsel %vm279, 0.0, %v1485
    %v1487 = vrot.slane %v1472, 4
    %v1488 = vsel %vm279, 0.0, %v1487
    %v1489 = vrot.slane %v1480, 4
    %v1490 = vsel %vm279, 0.0, %v1489
    %v1491 = vrot.slane %v1484, 4
    %v1492 = vsel %vm279, 0.0, %v1491
    %v1493 = vrot.slane %v1434, 4
    %v1494 = vsel %vm279, %v1493, %v1430
    %v1495 = vrot.slane %v1430, 4
    %v1496 = vsel %vm279, %v1434, %v1495
    %v1498 = vunpack.c.l.s4 1983009808
    %v1499 = vunpack.c.0.s8 %v1498
    %v1500 = vperm.slane %v1494, %v1499
    %v1502 = vunpack.c.l.s4 1983009808
    %v1503 = vunpack.c.0.s8 %v1502
    %v1504 = vperm.slane %v1496, %v1503
    %v1505 = vrot.slane %v1436, 4
    %v1506 = vsel %vm279, %v1505, %v1432
    %v1507 = vrot.slane %v1432, 4
    %v1508 = vsel %vm279, %v1436, %v1507
    %v1510 = vunpack.c.l.s4 1983009808
    %v1511 = vunpack.c.0.s8 %v1510
    %v1512 = vperm.slane %v1506, %v1511
    %v1514 = vunpack.c.l.s4 1983009808
    %v1515 = vunpack.c.0.s8 %v1514
    %v1516 = vperm.slane %v1508, %v1515
    %v1517 = vrot.slane %v1512, 4
    %v1518 = vsel %vm279, %v1517, %v1500
    %v1519 = vrot.slane %v1500, 4
    %v1520 = vsel %vm279, %v1512, %v1519
    %v1522 = vunpack.c.l.s4 1934713408
    %v1523 = vunpack.c.0.s8 %v1522
    %v1524 = vperm.slane %v1518, %v1523
    %v1526 = vunpack.c.l.s4 1934713408
    %v1527 = vunpack.c.0.s8 %v1526
    %v1528 = vperm.slane %v1520, %v1527
    %v1529 = vrot.slane %v1516, 4
    %v1530 = vsel %vm279, %v1529, %v1504
    %v1531 = vrot.slane %v1504, 4
    %v1532 = vsel %vm279, %v1516, %v1531
    %v1534 = vunpack.c.l.s4 1934713408
    %v1535 = vunpack.c.0.s8 %v1534
    %v1536 = vperm.slane %v1530, %v1535
    %v1538 = vunpack.c.l.s4 1934713408
    %v1539 = vunpack.c.0.s8 %v1538
    %v1540 = vperm.slane %v1532, %v1539
    %v1541 = vrot.slane %v1524, 4
    %v1542 = vsel %vm279, 0.0, %v1541
    %v1543 = vrot.slane %v1528, 4
    %v1544 = vsel %vm279, 0.0, %v1543
    %v1545 = vrot.slane %v1536, 4
    %v1546 = vsel %vm279, 0.0, %v1545
    %v1547 = vrot.slane %v1540, 4
    %v1548 = vsel %vm279, 0.0, %v1547
    %v1549 = vsel %vm279, %v1487, %v1468
    %v1551 = vunpack.c.l.s4 1983009808
    %v1552 = vunpack.c.0.s8 %v1551
    %v1553 = vperm.slane %v1549, %v1552
    %v1554 = vrot.slane %v1488, 4
    %v1555 = vsel %vm279, %v1554, %v1486
    %v1557 = vunpack.c.l.s4 1983009808
    %v1558 = vunpack.c.0.s8 %v1557
    %v1559 = vperm.slane %v1555, %v1558
    %v1560 = vsel %vm279, %v1491, %v1480
    %v1562 = vunpack.c.l.s4 1983009808
    %v1563 = vunpack.c.0.s8 %v1562
    %v1564 = vperm.slane %v1560, %v1563
    %v1565 = vrot.slane %v1492, 4
    %v1566 = vsel %vm279, %v1565, %v1490
    %v1568 = vunpack.c.l.s4 1983009808
    %v1569 = vunpack.c.0.s8 %v1568
    %v1570 = vperm.slane %v1566, %v1569
    %v1571 = vrot.slane %v1559, 4
    %v1572 = vsel %vm279, %v1571, %v1553
    %v1573 = vrot.slane %v1553, 4
    %v1574 = vsel %vm279, %v1559, %v1573
    %v1576 = vunpack.c.l.s4 1934713408
    %v1577 = vunpack.c.0.s8 %v1576
    %v1578 = vperm.slane %v1572, %v1577
    %v1580 = vunpack.c.l.s4 1934713408
    %v1581 = vunpack.c.0.s8 %v1580
    %v1582 = vperm.slane %v1574, %v1581
    %v1583 = vrot.slane %v1570, 4
    %v1584 = vsel %vm279, %v1583, %v1564
    %v1585 = vrot.slane %v1564, 4
    %v1586 = vsel %vm279, %v1570, %v1585
    %v1588 = vunpack.c.l.s4 1934713408
    %v1589 = vunpack.c.0.s8 %v1588
    %v1590 = vperm.slane %v1584, %v1589
    %v1592 = vunpack.c.l.s4 1934713408
    %v1593 = vunpack.c.0.s8 %v1592
    %v1594 = vperm.slane %v1586, %v1593
    %v1595 = vrot.slane %v1590, 4
    %v1596 = vsel %vm279, %v1595, %v1578
    %v1597 = vrot.slane %v1578, 4
    %v1598 = vsel %vm279, %v1590, %v1597
    %v1599 = vrot.slane %v1594, 4
    %v1600 = vsel %vm279, %v1599, %v1582
    %v1601 = vrot.slane %v1582, 4
    %v1602 = vsel %vm279, %v1594, %v1601
    %v1603 = vsel %vm279, %v1543, %v1524
    %v1605 = vunpack.c.l.s4 1983009808
    %v1606 = vunpack.c.0.s8 %v1605
    %v1607 = vperm.slane %v1603, %v1606
    %v1608 = vrot.slane %v1544, 4
    %v1609 = vsel %vm279, %v1608, %v1542
    %v1611 = vunpack.c.l.s4 1983009808
    %v1612 = vunpack.c.0.s8 %v1611
    %v1613 = vperm.slane %v1609, %v1612
    %v1614 = vsel %vm279, %v1547, %v1536
    %v1616 = vunpack.c.l.s4 1983009808
    %v1617 = vunpack.c.0.s8 %v1616
    %v1618 = vperm.slane %v1614, %v1617
    %v1619 = vrot.slane %v1548, 4
    %v1620 = vsel %vm279, %v1619, %v1546
    %v1622 = vunpack.c.l.s4 1983009808
    %v1623 = vunpack.c.0.s8 %v1622
    %v1624 = vperm.slane %v1620, %v1623
    %v1625 = vrot.slane %v1613, 4
    %v1626 = vsel %vm279, %v1625, %v1607
    %v1627 = vrot.slane %v1607, 4
    %v1628 = vsel %vm279, %v1613, %v1627
    %v1630 = vunpack.c.l.s4 1934713408
    %v1631 = vunpack.c.0.s8 %v1630
    %v1632 = vperm.slane %v1626, %v1631
    %v1634 = vunpack.c.l.s4 1934713408
    %v1635 = vunpack.c.0.s8 %v1634
    %v1636 = vperm.slane %v1628, %v1635
    %v1637 = vrot.slane %v1624, 4
    %v1638 = vsel %vm279, %v1637, %v1618
    %v1639 = vrot.slane %v1618, 4
    %v1640 = vsel %vm279, %v1624, %v1639
    %v1642 = vunpack.c.l.s4 1934713408
    %v1643 = vunpack.c.0.s8 %v1642
    %v1644 = vperm.slane %v1638, %v1643
    %v1646 = vunpack.c.l.s4 1934713408
    %v1647 = vunpack.c.0.s8 %v1646
    %v1648 = vperm.slane %v1640, %v1647
    %v1649 = vrot.slane %v1644, 4
    %v1650 = vsel %vm279, %v1649, %v1632
    %v1651 = vrot.slane %v1632, 4
    %v1652 = vsel %vm279, %v1644, %v1651
    %v1653 = vrot.slane %v1648, 4
    %v1654 = vsel %vm279, %v1653, %v1636
    %v1655 = vrot.slane %v1636, 4
    %v1656 = vsel %vm279, %v1648, %v1655
    %1659 = vrot.lane.b32.xlu0 %v1598, 8
    %v1660 = vpop.permute.xlu0 %1659
    %1661 = vrot.lane.b32.xlu0 %v1652, 8
    %v1662 = vpop.permute.xlu0 %1661
    %1667 = vrot.lane.b32.xlu0 %v1600, 16
    %v1668 = vpop.permute.xlu0 %1667
    %1669 = vrot.lane.b32.xlu0 %v1654, 16
    %v1670 = vpop.permute.xlu0 %1669
    %1675 = vrot.lane.b32.xlu0 %v1602, 24
    %v1676 = vpop.permute.xlu0 %1675
    %1677 = vrot.lane.b32.xlu0 %v1656, 24
    %v1678 = vpop.permute.xlu0 %1677
    %v1681 = vsel %vm956, %v1596, %v1660
    %v1682 = vsel %vm956, %v1650, %v1662
    %vm1683 = vcmask 130048
    %v1684 = vsel %vm1683, %v1681, %v1668
    %v1685 = vsel %vm1683, %v1682, %v1670
    %vm1686 = vcmask 195584
    %v1687 = vsel %vm1686, %v1684, %v1676
    %v1688 = vsel %vm1686, %v1685, %v1678
    %v1689 = vld [vmem:[%s5] sm:$0xff]
    %v1690 = vld [vmem:[%s5 + $0x8] sm:$0xff]
    %v1691 = vld [vmem:[%s5 + $0x10] sm:$0xff]
    %v1692 = vld [vmem:[%s5 + $0x18] sm:$0xff]
    %v1694 = vsel %vm83, %v1687, 0
    %v1697 = vsel %vm83, %v1688, 0
    %1699 = vmatpush.msra.mxu0 0.0
    %1700 = vmatpush.msra.mxu0 0.0
    %1701 = vmatpush.msra.mxu0 0.0
    %1702 = vmatpush.msra.mxu0 0.0
    %1703 = vmatpush.msra.mxu0 0.0
    %1704 = vmatpush.msra.mxu0 0.0
    %1705 = vmatpush.msra.mxu0 0.0
    %1706 = vmatpush.msra.mxu0 0.0
    %1707 = vmatpush.msra.mxu0 0.0
    %1708 = vmatpush.msra.mxu0 0.0
    %1709 = vmatpush.msra.mxu0 0.0
    %1710 = vmatpush.msra.mxu0 0.0
    %1711 = vmatpush.msra.mxu0 %v1692
    %1712 = vmatpush.msra.mxu0 %v1691
    %1713 = vmatpush.msra.mxu0 %v1690
    %1714 = vmatpush.msra.mxu0 %v1689
    %1715 = vmatmul.f32.gmra.mxu0 %v1694
    %v1716 = vpop.f32.mrf.mxu0
    %v1717 = vadd.f32 0.0, %v1716
    %1718 = vmatmul.f32.gmra.mxu0 %v1697
    %v1719 = vpop.f32.mrf.mxu0
    %v1720 = vadd.f32 0.0, %v1719
    %1721 = vdwg.mxu0
    %v1722 = vadd.f32 %v79, %v1717
    %v1723 = vadd.f32 %v80, %v1720
    %v1724 = vld [vmem:[%s6] sm:$0x1]
    %v1725 = vld [vmem:[%s7] sm:$0x1]
    %v1726 = vsel %vm83, %v1722, 0.0
    %1727 = vadd.xlane.f32.xlu0 %v1726
    %v1728 = vpop.xlane.xlu0 %1727
    %v1729 = vsel %vm83, %v1723, 0.0
    %1730 = vadd.xlane.f32.xlu0 %v1729
    %v1731 = vpop.xlane.xlu0 %1730
    %v1732 = vmul.f32 %v1728, %v96
    %v1733 = vmul.f32 %v1731, %v96
    %v1734 = vsub.f32 %v1722, %v1732
    %v1735 = vsub.f32 %v1723, %v1733
    %v1736 = vmul.f32 %v1734, %v1734
    %v1737 = vmul.f32 %v1735, %v1735
    %v1738 = vsel %vm83, %v1736, 0.0
    %1739 = vadd.xlane.f32.xlu0 %v1738
    %v1740 = vpop.xlane.xlu0 %1739
    %v1741 = vsel %vm83, %v1737, 0.0
    %1742 = vadd.xlane.f32.xlu0 %v1741
    %v1743 = vpop.xlane.xlu0 %1742
    %v1744 = vmul.f32 %v1740, %v96
    %v1745 = vmul.f32 %v1743, %v96
    %v1746 = vadd.f32 %v1744, 1e-12
    %v1747 = vadd.f32 %v1745, 1e-12
    %v1748 = vrsqrt.pop %v1746
    %v1749 = vmul.f32 %v1748, %v1746
    %v1750 = vmul.f32 %v1749, %v1748
    %v1751 = vmul.f32 0.5, %v1750
    %v1752 = vsub.f32 1.5, %v1751
    %v1753 = vmul.f32 %v1748, %v1752
    %v1754 = vmul.f32 %v1746, %v1753
    %vm1755 = vcmp.eq.f32.partialorder %v1746, inf
    %v1756 = vsel %vm1755, %v1746, %v1754
    %vm1757 = vcmp.eq.f32.partialorder %v1746, 0.0
    %v1758 = vand.u32 %v1746, 2147483648
    %v1759 = vsel %vm1757, %v1758, %v1756
    %v1760 = vrsqrt.pop %v1747
    %v1761 = vmul.f32 %v1760, %v1747
    %v1762 = vmul.f32 %v1761, %v1760
    %v1763 = vmul.f32 0.5, %v1762
    %v1764 = vsub.f32 1.5, %v1763
    %v1765 = vmul.f32 %v1760, %v1764
    %v1766 = vmul.f32 %v1747, %v1765
    %vm1767 = vcmp.eq.f32.partialorder %v1747, inf
    %v1768 = vsel %vm1767, %v1747, %v1766
    %vm1769 = vcmp.eq.f32.partialorder %v1747, 0.0
    %v1770 = vand.u32 %v1747, 2147483648
    %v1771 = vsel %vm1769, %v1770, %v1768
    %v1772 = vrcp.pop %v1759
    %v1773 = vmul.f32 %v1759, %v1772
    %v1774 = vsub.f32 1.0, %v1773
    %v1775 = vmul.f32 %v1772, %v1774
    %v1776 = vadd.f32 %v1772, %v1775
    %vm1777 = vweird.f32 %v1759
    %vm1778 = vweird.f32 %v1772
    %vm1779 = vmor %vm1777, %vm1778
    %v1780 = vsel %vm1779, %v1772, %v1776
    %v1781 = vand.u32 2147483647, %v1759
    %vm1782 = vcmp.eq.f32.partialorder %v1781, 8.507059e+37
    %v1783 = vand.u32 %v1759, 2147483648
    %v1784 = vor.u32 1.1754944e-38, %v1783
    %v1785 = vsel %vm1782, %v1784, %v1780
    %v1786 = vmul.f32 %v1734, %v1785
    %v1787 = vrcp.pop %v1771
    %v1788 = vmul.f32 %v1771, %v1787
    %v1789 = vsub.f32 1.0, %v1788
    %v1790 = vmul.f32 %v1787, %v1789
    %v1791 = vadd.f32 %v1787, %v1790
    %vm1792 = vweird.f32 %v1771
    %vm1793 = vweird.f32 %v1787
    %vm1794 = vmor %vm1792, %vm1793
    %v1795 = vsel %vm1794, %v1787, %v1791
    %v1796 = vand.u32 2147483647, %v1771
    %vm1797 = vcmp.eq.f32.partialorder %v1796, 8.507059e+37
    %v1798 = vand.u32 %v1771, 2147483648
    %v1799 = vor.u32 1.1754944e-38, %v1798
    %v1800 = vsel %vm1797, %v1799, %v1795
    %v1801 = vmul.f32 %v1735, %v1800
    %v1803 = vperm.slane %v1724, 0
    %v1805 = vmul.f32 %v1803, %v1786
    %v1806 = vmul.f32 %v1803, %v1801
    %v1808 = vperm.slane %v1725, 0
    %v1810 = vadd.f32 %v1805, %v1808
    %v1811 = vadd.f32 %v1806, %v1808
    %v1812 = vld [vmem:[%s8] sm:$0xff]
    %v1813 = vld [vmem:[%s8 + $0x8] sm:$0xff]
    %v1814 = vld [vmem:[%s8 + $0x10] sm:$0xff]
    %v1815 = vld [vmem:[%s8 + $0x18] sm:$0xff]
    %v1817 = vsel %vm83, %v1810, 0
    %v1820 = vsel %vm83, %v1811, 0
    %1822 = vmatpush.msra.mxu0 0.0
    %1823 = vmatpush.msra.mxu0 0.0
    %1824 = vmatpush.msra.mxu0 0.0
    %1825 = vmatpush.msra.mxu0 0.0
    %1826 = vmatpush.msra.mxu0 0.0
    %1827 = vmatpush.msra.mxu0 0.0
    %1828 = vmatpush.msra.mxu0 0.0
    %1829 = vmatpush.msra.mxu0 0.0
    %1830 = vmatpush.msra.mxu0 0.0
    %1831 = vmatpush.msra.mxu0 0.0
    %1832 = vmatpush.msra.mxu0 0.0
    %1833 = vmatpush.msra.mxu0 0.0
    %1834 = vmatpush.msra.mxu0 %v1815
    %1835 = vmatpush.msra.mxu0 %v1814
    %1836 = vmatpush.msra.mxu0 %v1813
    %1837 = vmatpush.msra.mxu0 %v1812
    %1838 = vmatmul.f32.gmra.mxu0 %v1817
    %v1839 = vpop.f32.mrf.mxu0
    %v1840 = vadd.f32 0.0, %v1839
    %1841 = vmatmul.f32.gmra.mxu0 %v1820
    %v1842 = vpop.f32.mrf.mxu0
    %v1843 = vadd.f32 0.0, %v1842
    %1844 = vdwg.mxu0
    %v1845 = vmul.f32 %v1840, 0.5
    %v1846 = vmul.f32 %v1843, 0.5
    %v1847 = vmul.f32 %v1840, 0.70710677
    %v1848 = vmul.f32 %v1843, 0.70710677
    %vm1849 = vcmp.ge.f32.partialorder %v1847, 0.0
    %vm1850 = vcmp.ge.f32.partialorder %v1848, 0.0
    %v1851 = vsel %vm1849, 1.0, -1.0
    %v1852 = vsel %vm1850, 1.0, -1.0
    %v1853 = vand.u32 2147483647, %v1847
    %v1854 = vand.u32 2147483647, %v1848
    %v1855 = vmul.f32 %v1853, 0.3275911
    %v1856 = vmul.f32 %v1854, 0.3275911
    %v1857 = vadd.f32 %v1855, 1.0
    %v1858 = vadd.f32 %v1856, 1.0
    %v1859 = vrcp.pop %v1857
    %v1860 = vmul.f32 %v1857, %v1859
    %v1861 = vsub.f32 1.0, %v1860
    %v1862 = vmul.f32 %v1859, %v1861
    %v1863 = vadd.f32 %v1859, %v1862
    %vm1864 = vweird.f32 %v1857
    %vm1865 = vweird.f32 %v1859
    %vm1866 = vmor %vm1864, %vm1865
    %v1867 = vsel %vm1866, %v1859, %v1863
    %v1868 = vand.u32 2147483647, %v1857
    %vm1869 = vcmp.eq.f32.partialorder %v1868, 8.507059e+37
    %v1870 = vand.u32 %v1857, 2147483648
    %v1871 = vor.u32 1.1754944e-38, %v1870
    %v1872 = vsel %vm1869, %v1871, %v1867
    %v1873 = vmul.f32 1.0, %v1872
    %v1874 = vrcp.pop %v1858
    %v1875 = vmul.f32 %v1858, %v1874
    %v1876 = vsub.f32 1.0, %v1875
    %v1877 = vmul.f32 %v1874, %v1876
    %v1878 = vadd.f32 %v1874, %v1877
    %vm1879 = vweird.f32 %v1858
    %vm1880 = vweird.f32 %v1874
    %vm1881 = vmor %vm1879, %vm1880
    %v1882 = vsel %vm1881, %v1874, %v1878
    %v1883 = vand.u32 2147483647, %v1858
    %vm1884 = vcmp.eq.f32.partialorder %v1883, 8.507059e+37
    %v1885 = vand.u32 %v1858, 2147483648
    %v1886 = vor.u32 1.1754944e-38, %v1885
    %v1887 = vsel %vm1884, %v1886, %v1882
    %v1888 = vmul.f32 1.0, %v1887
    %v1889 = vmul.f32 %v1873, 1.0614054
    %v1890 = vmul.f32 %v1888, 1.0614054
    %v1891 = vadd.f32 %v1889, -1.4531521
    %v1892 = vadd.f32 %v1890, -1.4531521
    %v1893 = vmul.f32 %v1891, %v1873
    %v1894 = vmul.f32 %v1892, %v1888
    %v1895 = vadd.f32 %v1893, 1.4214138
    %v1896 = vadd.f32 %v1894, 1.4214138
    %v1897 = vmul.f32 %v1895, %v1873
    %v1898 = vmul.f32 %v1896, %v1888
    %v1899 = vadd.f32 %v1897, -0.28449672
    %v1900 = vadd.f32 %v1898, -0.28449672
    %v1901 = vmul.f32 %v1899, %v1873
    %v1902 = vmul.f32 %v1900, %v1888
    %v1903 = vadd.f32 %v1901, 0.2548296
    %v1904 = vadd.f32 %v1902, 0.2548296
    %v1905 = vmul.f32 %v1903, %v1873
    %v1906 = vmul.f32 %v1904, %v1888
    %v1907 = vsub.f32 0.0, %v1853
    %v1908 = vsub.f32 0.0, %v1854
    %v1909 = vmul.f32 %v1907, %v1853
    %v1910 = vmul.f32 %v1908, %v1854
    %v1911 = vmul.f32 %v1909, 1.442695
    %v1912 = vpow.pop %v1911
    %v1913 = vmul.f32 %v1910, 1.442695
    %v1914 = vpow.pop %v1913
    %v1915 = vmul.f32 %v1905, %v1912
    %v1916 = vmul.f32 %v1906, %v1914
    %v1917 = vsub.f32 1.0, %v1915
    %v1918 = vsub.f32 1.0, %v1916
    %v1919 = vmul.f32 %v1851, %v1917
    %v1920 = vmul.f32 %v1852, %v1918
    %v1921 = vadd.f32 %v1919, 1.0
    %v1922 = vadd.f32 %v1920, 1.0
    %v1923 = vmul.f32 %v1845, %v1921
    %v1924 = vmul.f32 %v1846, %v1922
    %v1925 = vld [vmem:[%s9] sm:$0xff]
    %v1926 = vld [vmem:[%s9 + $0x8] sm:$0xff]
    %v1927 = vld [vmem:[%s9 + $0x10] sm:$0xff]
    %v1928 = vld [vmem:[%s9 + $0x18] sm:$0xff]
    %v1929 = vld [vmem:[%s9 + $0x20] sm:$0xff]
    %v1930 = vld [vmem:[%s9 + $0x28] sm:$0xff]
    %v1931 = vld [vmem:[%s9 + $0x30] sm:$0xff]
    %v1932 = vld [vmem:[%s9 + $0x38] sm:$0xff]
    %vm1933 = vcmask 523264
    %v1935 = vsel %vm1933, %v1923, 0
    %v1938 = vsel %vm1933, %v1924, 0
    %1940 = vmatpush.msra.mxu0 0.0
    %1941 = vmatpush.msra.mxu0 0.0
    %1942 = vmatpush.msra.mxu0 0.0
    %1943 = vmatpush.msra.mxu0 0.0
    %1944 = vmatpush.msra.mxu0 0.0
    %1945 = vmatpush.msra.mxu0 0.0
    %1946 = vmatpush.msra.mxu0 0.0
    %1947 = vmatpush.msra.mxu0 0.0
    %1948 = vmatpush.msra.mxu0 %v1932
    %1949 = vmatpush.msra.mxu0 %v1931
    %1950 = vmatpush.msra.mxu0 %v1930
    %1951 = vmatpush.msra.mxu0 %v1929
    %1952 = vmatpush.msra.mxu0 %v1928
    %1953 = vmatpush.msra.mxu0 %v1927
    %1954 = vmatpush.msra.mxu0 %v1926
    %1955 = vmatpush.msra.mxu0 %v1925
    %1956 = vmatmul.f32.gmra.mxu0 %v1935
    %v1957 = vpop.f32.mrf.mxu0
    %v1958 = vadd.f32 0.0, %v1957
    %1959 = vmatmul.f32.gmra.mxu0 %v1938
    %v1960 = vpop.f32.mrf.mxu0
    %v1961 = vadd.f32 0.0, %v1960
    %1962 = vdwg.mxu0
    %v1963 = vadd.f32 %v1722, %v1958
    %v1964 = vadd.f32 %v1723, %v1961
    %1965 = vst.msk [vmem:[#allocation8] sm:$0xff] %vm83, %v1963
    %1966 = vst.msk [vmem:[#allocation8 + $0x8] sm:$0xff] %vm83, %v1964
    // Predicated region
    $region54: #{tpu_custom_call.1} parent=1 // pred_check
      _
    $region55: #{tpu_custom_call.1} parent=1 // pred_check_branch
      %1968 = sbr.rel (0) target = $region57
    $region56: #{tpu_custom_call.1} parent=1 // pred_region
      %1970 = vsyncadd [#allocation4], 0
      %s1971 = sshll.u32 [#allocation8], 4
      %s1972 = int_to_ptr.vmem [resolvable:$true] %s1971
      %s1973 = sshll.u32 %s10, 4
      %s1974 = int_to_ptr.hbm [resolvable:$true] %s1973
      %1979 = dma.vmem_to_hbm [thread:$0]  %s1972, 256, %s1974, [#allocation4], 128, 128, 8
    $region57: #{tpu_custom_call.1} parent=1 // pred_fallthru
      _
    // Predicated region
    $region58: #{tpu_custom_call.1} parent=1 // pred_check
      _
    $region59: #{tpu_custom_call.1} parent=1 // pred_check_branch
      %1981 = sbr.rel (0) target = $region61
    $region60: #{tpu_custom_call.1} parent=1 // pred_region
      %1983 = dma.done [#allocation4], 256
    $region61: #{tpu_custom_call.1} parent=1 // pred_fallthru
      _
    %1984 = vsyncpa [#allocation3], 1
    %1985 = vsyncpa [#allocation6], 1
    %1986 = vsyncpa [#allocation4], 1

</llo_original>
